<compile_context>
chip_gen: v5e
topology: v5e:2x2
jax: 0.10.0
libtpu: 0.0.40
codegen_flags: <defaults>
</compile_context>

<pallas_src>
import jax
import jax.numpy as jnp
from jax.experimental import pallas as pl
from jax.experimental.pallas import tpu as pltpu


def _round_up(x, m):
    return ((x + m - 1) // m) * m


def _classifier_kernel(x_ref, w1_ref, b1_ref, w2_ref, b2_ref, w3_ref, b3_ref, o_ref):
    # fc1 + ReLU: bf16 MXU matmul, f32 accumulation, f32 bias/ReLU on the VPU.
    h1 = jnp.dot(x_ref[...], w1_ref[...], preferred_element_type=jnp.float32)
    h1 = jnp.maximum(h1 + b1_ref[...], 0.0)

    # fc2 + ReLU
    h2 = jnp.dot(h1.astype(jnp.bfloat16), w2_ref[...],
                 preferred_element_type=jnp.float32)
    h2 = jnp.maximum(h2 + b2_ref[...], 0.0)

    # Output head (out_dim == 1): VPU multiply + lane reduction instead of a
    # push/drain-dominated [H, 1] MXU pass with a lane-sparse result tile.
    logits = jnp.sum(h2 * w3_ref[...], axis=-1, keepdims=True) + b3_ref[...]

    # Sigmoid via EUP exp + approximate EUP reciprocal (VPU-slot free).
    e = jnp.exp(-logits)
    o_ref[...] = pl.reciprocal(1.0 + e, approx=True)


def classifier_forward(x, w1, b1, w2, b2, w3, b3, *, tile_b=128):
    """x: [B, 2805] f32. Weights stored as [in, out]; biases as [1, out]."""
    B, K = x.shape
    H = w1.shape[1]
    assert w3.shape[1] == 1, "output head is specialised to out_dim == 1"

    # Padding / dtype prep (pad regions are zeros -> contribute nothing).
    Kp = _round_up(K, 128)                   # 2805 -> 2816: full-width K tiles
    tile_b = min(tile_b, _round_up(B, 16))   # shrink tile for tiny batches
    Bp = _round_up(B, tile_b)

    x_b = jnp.pad(x.astype(jnp.bfloat16), ((0, Bp - B), (0, Kp - K)))
    w1_b = jnp.pad(w1.astype(jnp.bfloat16), ((0, Kp - K), (0, 0)))
    w2_b = w2.astype(jnp.bfloat16)
    w3_row = w3.astype(jnp.bfloat16).T       # [1, H] row for VPU mul + reduce
    b1_f = b1.astype(jnp.float32)
    b2_f = b2.astype(jnp.float32)
    b3_f = b3.astype(jnp.float32)

    grid = (Bp // tile_b,)
    flops = 2 * Bp * Kp * H + 2 * Bp * H * H + 2 * Bp * H
    bytes_accessed = (
        x_b.size * 2 + w1_b.size * 2 + w2_b.size * 2 + w3_row.size * 2
        + (b1_f.size + b2_f.size + b3_f.size) * 4 + Bp * 4)

    out_padded = pl.pallas_call(
        _classifier_kernel,
        out_shape=jax.ShapeDtypeStruct((Bp, 1), jnp.float32),
        grid=grid,
        in_specs=[
            pl.BlockSpec((tile_b, Kp), lambda i: (i, 0)),  # x tile (pipelined)
            pl.BlockSpec((Kp, H), lambda i: (0, 0)),       # w1 (VMEM-resident)
            pl.BlockSpec((1, H), lambda i: (0, 0)),        # b1
            pl.BlockSpec((H, H), lambda i: (0, 0)),        # w2
            pl.BlockSpec((1, H), lambda i: (0, 0)),        # b2
            pl.BlockSpec((1, H), lambda i: (0, 0)),        # w3 as a row
            pl.BlockSpec((1, 1), lambda i: (0, 0)),        # b3
        ],
        out_specs=pl.BlockSpec((tile_b, 1), lambda i: (i, 0)),
        compiler_params=pltpu.CompilerParams(
            dimension_semantics=("parallel",)),
        cost_estimate=pl.CostEstimate(
            flops=flops, transcendentals=2 * Bp, bytes_accessed=bytes_accessed),
    )(x_b, w1_b, b1_f, w2_b, b2_f, w3_row, b3_f)

    return out_padded[:B]


def init_params(key, input_dim, hidden_dim, output_dim):
    """Deterministic init mimicking torch.nn.Linear (U[-1/sqrt(fan_in), +1/sqrt(fan_in)])."""
    ks = jax.random.split(key, 6)

    def linear(kw, kb, fan_in, fan_out):
        bound = 1.0 / jnp.sqrt(fan_in)
        w = jax.random.uniform(kw, (fan_in, fan_out), jnp.float32, -bound, bound)
        b = jax.random.uniform(kb, (1, fan_out), jnp.float32, -bound, bound)
        return w, b

    w1, b1 = linear(ks[0], ks[1], input_dim, hidden_dim)
    w2, b2 = linear(ks[2], ks[3], hidden_dim, hidden_dim)
    w3, b3 = linear(ks[4], ks[5], hidden_dim, output_dim)
    return w1, b1, w2, b2, w3, b3


if __name__ == "__main__":
    INPUT_DIM = 55 * 51     # 2805, fixed by the module
    HIDDEN_DIM = 128        # args.classfier_hidden_dim (TPU-friendly choice)
    OUTPUT_DIM = 1
    BATCH = 8

    key = jax.random.PRNGKey(0)
    kx, kp = jax.random.split(key)

    x = jax.random.normal(kx, (BATCH, INPUT_DIM), dtype=jnp.float32)
    params = init_params(kp, INPUT_DIM, HIDDEN_DIM, OUTPUT_DIM)

    out = classifier_forward(x, *params)
    out = jax.block_until_ready(out)
    assert out.shape == (BATCH, OUTPUT_DIM)

    # Pure-JAX reference with the same bf16-input / f32-accumulate policy.
    w1, b1, w2, b2, w3, b3 = params
    h1 = jnp.maximum(
        jnp.dot(x.astype(jnp.bfloat16), w1.astype(jnp.bfloat16),
                preferred_element_type=jnp.float32) + b1, 0.0)
    h2 = jnp.maximum(
        jnp.dot(h1.astype(jnp.bfloat16), w2.astype(jnp.bfloat16),
                preferred_element_type=jnp.float32) + b2, 0.0)
    logits = jnp.sum(h2 * w3.astype(jnp.bfloat16).T, axis=-1, keepdims=True) + b3
    ref = jax.nn.sigmoid(logits)

    assert jnp.allclose(out, ref, atol=1e-2, rtol=1e-2), (
        f"max abs err {jnp.max(jnp.abs(out - ref))}")

    print("KERNEL_OK")
</pallas_src>

<mosaic_0001>
module attributes {stable_mosaic.version = 11 : i64} {
  func.func @_classifier_kernel(%arg0: i32, %arg1: memref<16x2816xbf16, #tpu.memory_space<vmem>>, %arg2: memref<2816x128xbf16, #tpu.memory_space<vmem>>, %arg3: memref<1x128xf32, #tpu.memory_space<vmem>>, %arg4: memref<128x128xbf16, #tpu.memory_space<vmem>>, %arg5: memref<1x128xf32, #tpu.memory_space<vmem>>, %arg6: memref<1x128xbf16, #tpu.memory_space<vmem>>, %arg7: memref<1x1xf32, #tpu.memory_space<vmem>>, %arg8: memref<16x1xf32, #tpu.memory_space<vmem>>) attributes {dimension_semantics = [#tpu.dimension_semantics<parallel>], iteration_bounds = array<i64: 1>, scalar_prefetch = 0 : i64, scratch_operands = 0 : i64, tpu.core_type = #tpu.core_type<tc>, window_params = [{transform_indices = @transform_0, window_bounds = array<i64: 16, 2816>}, {pipeline_mode = #tpu.pipeline_mode<synchronous>, transform_indices = @transform_1, window_bounds = array<i64: 2816, 128>}, {pipeline_mode = #tpu.pipeline_mode<synchronous>, transform_indices = @transform_2, window_bounds = array<i64: 1, 128>}, {pipeline_mode = #tpu.pipeline_mode<synchronous>, transform_indices = @transform_3, window_bounds = array<i64: 128, 128>}, {pipeline_mode = #tpu.pipeline_mode<synchronous>, transform_indices = @transform_4, window_bounds = array<i64: 1, 128>}, {pipeline_mode = #tpu.pipeline_mode<synchronous>, transform_indices = @transform_5, window_bounds = array<i64: 1, 128>}, {pipeline_mode = #tpu.pipeline_mode<synchronous>, transform_indices = @transform_6, window_bounds = array<i64: 1, 1>}, {transform_indices = @transform_7, window_bounds = array<i64: 16, 1>}]} {
    %c0 = arith.constant 0 : index
    %c0_0 = arith.constant 0 : index
    %0 = vector.load %arg1[%c0, %c0_0] : memref<16x2816xbf16, #tpu.memory_space<vmem>>, vector<16x2816xbf16>
    %c0_1 = arith.constant 0 : index
    %c0_2 = arith.constant 0 : index
    %1 = vector.load %arg2[%c0_1, %c0_2] : memref<2816x128xbf16, #tpu.memory_space<vmem>>, vector<2816x128xbf16>
    %cst = arith.constant dense<0.000000e+00> : vector<16x128xf32>
    %2 = tpu.matmul %0, %1, %cst {dimension_numbers = #tpu.dot_dimension_numbers<[1], [0], [0], [1], [0, 0, 1, 1], [], []>} : vector<16x2816xbf16>, vector<2816x128xbf16>, vector<16x128xf32> -> vector<16x128xf32>
    %c0_3 = arith.constant 0 : index
    %c0_4 = arith.constant 0 : index
    %3 = vector.load %arg3[%c0_3, %c0_4] : memref<1x128xf32, #tpu.memory_space<vmem>>, vector<1x128xf32>
    %4 = vector.broadcast %3 : vector<1x128xf32> to vector<16x128xf32>
    %5 = arith.addf %2, %4 : vector<16x128xf32>
    %cst_5 = arith.constant 0.000000e+00 : f32
    %6 = vector.broadcast %cst_5 : f32 to vector<16x128xf32>
    %7 = arith.maximumf %5, %6 : vector<16x128xf32>
    %8 = arith.truncf %7 : vector<16x128xf32> to vector<16x128xbf16>
    %c0_6 = arith.constant 0 : index
    %c0_7 = arith.constant 0 : index
    %9 = vector.load %arg4[%c0_6, %c0_7] : memref<128x128xbf16, #tpu.memory_space<vmem>>, vector<128x128xbf16>
    %cst_8 = arith.constant dense<0.000000e+00> : vector<16x128xf32>
    %10 = tpu.matmul %8, %9, %cst_8 {dimension_numbers = #tpu.dot_dimension_numbers<[1], [0], [0], [1], [0, 0, 1, 1], [], []>} : vector<16x128xbf16>, vector<128x128xbf16>, vector<16x128xf32> -> vector<16x128xf32>
    %c0_9 = arith.constant 0 : index
    %c0_10 = arith.constant 0 : index
    %11 = vector.load %arg5[%c0_9, %c0_10] : memref<1x128xf32, #tpu.memory_space<vmem>>, vector<1x128xf32>
    %12 = vector.broadcast %11 : vector<1x128xf32> to vector<16x128xf32>
    %13 = arith.addf %10, %12 : vector<16x128xf32>
    %cst_11 = arith.constant 0.000000e+00 : f32
    %14 = vector.broadcast %cst_11 : f32 to vector<16x128xf32>
    %15 = arith.maximumf %13, %14 : vector<16x128xf32>
    %c0_12 = arith.constant 0 : index
    %c0_13 = arith.constant 0 : index
    %16 = vector.load %arg6[%c0_12, %c0_13] : memref<1x128xbf16, #tpu.memory_space<vmem>>, vector<1x128xbf16>
    %17 = arith.extf %16 : vector<1x128xbf16> to vector<1x128xf32>
    %18 = vector.broadcast %17 : vector<1x128xf32> to vector<16x128xf32>
    %19 = arith.mulf %15, %18 : vector<16x128xf32>
    %cst_14 = arith.constant dense<0.000000e+00> : vector<16xf32>
    %20 = vector.multi_reduction <add>, %19, %cst_14 [1] : vector<16x128xf32> to vector<16xf32>
    %21 = vector.shape_cast %20 : vector<16xf32> to vector<16x1xf32>
    %c0_15 = arith.constant 0 : index
    %c0_16 = arith.constant 0 : index
    %22 = vector.load %arg7[%c0_15, %c0_16] : memref<1x1xf32, #tpu.memory_space<vmem>>, vector<1x1xf32>
    %23 = vector.broadcast %22 : vector<1x1xf32> to vector<16x1xf32>
    %24 = arith.addf %21, %23 : vector<16x1xf32>
    %cst_17 = arith.constant 0.000000e+00 : f32
    %25 = vector.broadcast %cst_17 : f32 to vector<16x1xf32>
    %26 = arith.subf %25, %24 : vector<16x1xf32>
    %27 = math.exp %26 : vector<16x1xf32>
    %cst_18 = arith.constant 1.000000e+00 : f32
    %28 = vector.broadcast %cst_18 : f32 to vector<16x1xf32>
    %29 = arith.addf %28, %27 : vector<16x1xf32>
    %30 = tpu.reciprocal %29 {approx = true} : vector<16x1xf32> -> vector<16x1xf32>
    %c0_19 = arith.constant 0 : index
    %c0_20 = arith.constant 0 : index
    %31 = vector.load %arg8[%c0_19, %c0_20] : memref<16x1xf32, #tpu.memory_space<vmem>>, vector<16x1xf32>
    tpu.vector_store %arg8[%c0_19, %c0_20], %30 {strides = array<i32>} : memref<16x1xf32, #tpu.memory_space<vmem>>, vector<16x1xf32>,
    return
  }
  func.func @transform_0(%arg0: i32) -> (i32, i32) {
    %c0_i32 = arith.constant 0 : i32
    %c0_i32_0 = arith.constant 0 : i32
    return %arg0, %c0_i32 : i32, i32
  }
  func.func @transform_1(%arg0: i32) -> (i32, i32) {
    %c0_i32 = arith.constant 0 : i32
    %c0_i32_0 = arith.constant 0 : i32
    %c0_i32_1 = arith.constant 0 : i32
    return %c0_i32, %c0_i32_0 : i32, i32
  }
  func.func @transform_2(%arg0: i32) -> (i32, i32) {
    %c0_i32 = arith.constant 0 : i32
    %c0_i32_0 = arith.constant 0 : i32
    %c0_i32_1 = arith.constant 0 : i32
    return %c0_i32, %c0_i32_0 : i32, i32
  }
  func.func @transform_3(%arg0: i32) -> (i32, i32) {
    %c0_i32 = arith.constant 0 : i32
    %c0_i32_0 = arith.constant 0 : i32
    %c0_i32_1 = arith.constant 0 : i32
    return %c0_i32, %c0_i32_0 : i32, i32
  }
  func.func @transform_4(%arg0: i32) -> (i32, i32) {
    %c0_i32 = arith.constant 0 : i32
    %c0_i32_0 = arith.constant 0 : i32
    %c0_i32_1 = arith.constant 0 : i32
    return %c0_i32, %c0_i32_0 : i32, i32
  }
  func.func @transform_5(%arg0: i32) -> (i32, i32) {
    %c0_i32 = arith.constant 0 : i32
    %c0_i32_0 = arith.constant 0 : i32
    %c0_i32_1 = arith.constant 0 : i32
    return %c0_i32, %c0_i32_0 : i32, i32
  }
  func.func @transform_6(%arg0: i32) -> (i32, i32) {
    %c0_i32 = arith.constant 0 : i32
    %c0_i32_0 = arith.constant 0 : i32
    %c0_i32_1 = arith.constant 0 : i32
    return %c0_i32, %c0_i32_0 : i32, i32
  }
  func.func @transform_7(%arg0: i32) -> (i32, i32) {
    %c0_i32 = arith.constant 0 : i32
    %c0_i32_0 = arith.constant 0 : i32
    return %arg0, %c0_i32 : i32, i32
  }
}

</mosaic_0001>

<llo_original>
// kernel: tpu_custom_call.1
$region0: #{tpu_custom_call.1}
  #allocation0 [shape = 'u32[]', space=smem, size = 0x4, offset = 0x4, fixed_abs, tag = 'smem constant byte address 0x4 - core index']
  #allocation1 [shape = 'u32[72,128]{1,0:T(1,128)}', space=vmem, size = 0x9000, scoped, tag = 'internal scratch']
  #allocation2 [shape = 'f32[1,1]{1,0:T(1,128)S(1)}', space=vmem, size = 0x200, scoped, tag = 'scoped memory for tpu_custom_call.1']
  %s0 = inlined_call_operand.hbm [shape: bf16[16,2816], index: 0, kind: input, shape index: {}]
  %s1 = inlined_call_operand.hbm [shape: bf16[2816,128], index: 1, kind: input, shape index: {}]
  %s2 = inlined_call_operand.vmem [shape: f32[1,128], index: 2, kind: input, shape index: {}]
  %s3 = inlined_call_operand.hbm [shape: bf16[128,128], index: 3, kind: input, shape index: {}]
  %s4 = inlined_call_operand.vmem [shape: f32[1,128], index: 4, kind: input, shape index: {}]
  %s5 = inlined_call_operand.vmem [shape: bf16[1,128], index: 5, kind: input, shape index: {}]
  %s6 = inlined_call_operand.<no memory space> [shape: f32[1,1], index: 6, kind: input, shape index: {}]
  %s7 = inlined_call_operand.vmem [shape: f32[16,1], index: 7, kind: output, shape index: {}]
  %s8 = sld [smem:[#allocation0]]
  $region50: #{tpu_custom_call.1} parent=0
    _
  %s10 = ssub.s32 1, %s8
  %s11 = scalar_select 0, %s10, %s8
  %v12 = vstv %s6
  %13 = vst [vmem:[#allocation2] sm:$0x1] %v12
  $region1: #{tpu_custom_call.1} parent=0
    #allocation3 [shape = 'u8[90112]{0}', space=vmem, size = 0x16000, scoped, tag = 'input window, operand 0, single buffered']
    #allocation4 [shape = 's32[1]{0}', space=sflag, size = 0x4, scoped, tag = 'scoped memory for tpu_custom_call.1']
    #allocation5 [shape = 'u8[720896]{0}', space=vmem, size = 0xb0000, scoped, tag = 'input window, operand 1, single buffered']
    #allocation6 [shape = 's32[1]{0}', space=sflag, size = 0x4, scoped, tag = 'scoped memory for tpu_custom_call.1']
    #allocation7 [shape = 'u8[32768]{0}', space=vmem, size = 0x8000, scoped, tag = 'input window, operand 3, single buffered']
    %14 = vsyncpa [#allocation4], 0
    %15 = vsyncpa [#allocation6], 0
    // Predicated region
    $region2: #{tpu_custom_call.1} parent=1 // pred_check
      _
    $region3: #{tpu_custom_call.1} parent=1 // pred_check_branch
      %17 = sbr.rel (0) target = $region5
    $region4: #{tpu_custom_call.1} parent=1 // pred_region
      %19 = vsyncadd [#allocation4], 0
      %s20 = sshll.u32 %s0, 4
      %s21 = int_to_ptr.hbm [resolvable:$true] %s20
      %s22 = sshll.u32 [#allocation3], 4
      %s23 = int_to_ptr.vmem [resolvable:$true] %s22
      %28 = dma.hbm_to_vmem [thread:$0]  %s21, 2816, %s23, [#allocation4], 1408, 1408, 88
    $region5: #{tpu_custom_call.1} parent=1 // pred_fallthru
      _
    // Predicated region
    $region6: #{tpu_custom_call.1} parent=1 // pred_check
      _
    $region7: #{tpu_custom_call.1} parent=1 // pred_check_branch
      %30 = sbr.rel (0) target = $region9
    $region8: #{tpu_custom_call.1} parent=1 // pred_region
      %32 = vsyncadd [#allocation6], 0
      %s33 = sshll.u32 %s1, 4
      %s34 = int_to_ptr.hbm [resolvable:$true] %s33
      %s35 = sshll.u32 [#allocation5], 4
      %s36 = int_to_ptr.vmem [resolvable:$true] %s35
      %41 = dma.hbm_to_vmem [thread:$0]  %s34, 22528, %s36, [#allocation6], 64, 64, 4
    $region9: #{tpu_custom_call.1} parent=1 // pred_fallthru
      _
    // Predicated region
    $region10: #{tpu_custom_call.1} parent=1 // pred_check
      _
    $region11: #{tpu_custom_call.1} parent=1 // pred_check_branch
      %43 = sbr.rel (0) target = $region13
    $region12: #{tpu_custom_call.1} parent=1 // pred_region
      _
    $region13: #{tpu_custom_call.1} parent=1 // pred_fallthru
      _
    // Predicated region
    $region14: #{tpu_custom_call.1} parent=1 // pred_check
      _
    $region15: #{tpu_custom_call.1} parent=1 // pred_check_branch
      %45 = sbr.rel (0) target = $region17
    $region16: #{tpu_custom_call.1} parent=1 // pred_region
      %47 = vsyncadd [#allocation6], 0
      %s48 = sshll.u32 %s3, 4
      %s49 = int_to_ptr.hbm [resolvable:$true] %s48
      %s50 = sshll.u32 [#allocation7], 4
      %s51 = int_to_ptr.vmem [resolvable:$true] %s50
      %56 = dma.hbm_to_vmem [thread:$0]  %s49, 1024, %s51, [#allocation6], 64, 64, 4
    $region17: #{tpu_custom_call.1} parent=1 // pred_fallthru
      _
    // Predicated region
    $region18: #{tpu_custom_call.1} parent=1 // pred_check
      _
    $region19: #{tpu_custom_call.1} parent=1 // pred_check_branch
      %58 = sbr.rel (0) target = $region21
    $region20: #{tpu_custom_call.1} parent=1 // pred_region
      _
    $region21: #{tpu_custom_call.1} parent=1 // pred_fallthru
      _
    // Predicated region
    $region22: #{tpu_custom_call.1} parent=1 // pred_check
      _
    $region23: #{tpu_custom_call.1} parent=1 // pred_check_branch
      %60 = sbr.rel (0) target = $region25
    $region24: #{tpu_custom_call.1} parent=1 // pred_region
      _
    $region25: #{tpu_custom_call.1} parent=1 // pred_fallthru
      _
    // Predicated region
    $region26: #{tpu_custom_call.1} parent=1 // pred_check
      _
    $region27: #{tpu_custom_call.1} parent=1 // pred_check_branch
      %62 = sbr.rel (0) target = $region29
    $region28: #{tpu_custom_call.1} parent=1 // pred_region
      _
    $region29: #{tpu_custom_call.1} parent=1 // pred_fallthru
      _
    // Predicated region
    $region30: #{tpu_custom_call.1} parent=1 // pred_check
      _
    $region31: #{tpu_custom_call.1} parent=1 // pred_check_branch
      %64 = sbr.rel (0) target = $region33
    $region32: #{tpu_custom_call.1} parent=1 // pred_region
      %66 = dma.done [#allocation4], 2816
    $region33: #{tpu_custom_call.1} parent=1 // pred_fallthru
      _
    // Predicated region
    $region34: #{tpu_custom_call.1} parent=1 // pred_check
      _
    $region35: #{tpu_custom_call.1} parent=1 // pred_check_branch
      %68 = sbr.rel (0) target = $region37
    $region36: #{tpu_custom_call.1} parent=1 // pred_region
      %70 = dma.done [#allocation6], 22528
    $region37: #{tpu_custom_call.1} parent=1 // pred_fallthru
      _
    // Predicated region
    $region38: #{tpu_custom_call.1} parent=1 // pred_check
      _
    $region39: #{tpu_custom_call.1} parent=1 // pred_check_branch
      %72 = sbr.rel (0) target = $region41
    $region40: #{tpu_custom_call.1} parent=1 // pred_region
      %74 = dma.done [#allocation6], 1024
    $region41: #{tpu_custom_call.1} parent=1 // pred_fallthru
      _
    %v75 = vld [vmem:[#allocation3] sm:$0xff]
    %v76 = vld [vmem:[#allocation3 + $0x8] sm:$0xff]
    %v77 = vld [vmem:[#allocation3 + $0x10] sm:$0xff]
    %v78 = vld [vmem:[#allocation3 + $0x18] sm:$0xff]
    %v79 = vld [vmem:[#allocation3 + $0x20] sm:$0xff]
    %v80 = vld [vmem:[#allocation3 + $0x28] sm:$0xff]
    %v81 = vld [vmem:[#allocation3 + $0x30] sm:$0xff]
    %v82 = vld [vmem:[#allocation3 + $0x38] sm:$0xff]
    %v83 = vld [vmem:[#allocation3 + $0x40] sm:$0xff]
    %v84 = vld [vmem:[#allocation3 + $0x48] sm:$0xff]
    %v85 = vld [vmem:[#allocation3 + $0x50] sm:$0xff]
    %v86 = vld [vmem:[#allocation3 + $0x58] sm:$0xff]
    %v87 = vld [vmem:[#allocation3 + $0x60] sm:$0xff]
    %v88 = vld [vmem:[#allocation3 + $0x68] sm:$0xff]
    %v89 = vld [vmem:[#allocation3 + $0x70] sm:$0xff]
    %v90 = vld [vmem:[#allocation3 + $0x78] sm:$0xff]
    %v91 = vld [vmem:[#allocation3 + $0x80] sm:$0xff]
    %v92 = vld [vmem:[#allocation3 + $0x88] sm:$0xff]
    %v93 = vld [vmem:[#allocation3 + $0x90] sm:$0xff]
    %v94 = vld [vmem:[#allocation3 + $0x98] sm:$0xff]
    %v95 = vld [vmem:[#allocation3 + $0xa0] sm:$0xff]
    %v96 = vld [vmem:[#allocation3 + $0xa8] sm:$0xff]
    %v97 = vld [vmem:[#allocation5] sm:$0xf]
    %v98 = vld [vmem:[#allocation5 + $0x4] sm:$0xf]
    %v99 = vld [vmem:[#allocation5 + $0x8] sm:$0xf]
    %v100 = vld [vmem:[#allocation5 + $0xc] sm:$0xf]
    %v101 = vld [vmem:[#allocation5 + $0x10] sm:$0xf]
    %v102 = vld [vmem:[#allocation5 + $0x14] sm:$0xf]
    %v103 = vld [vmem:[#allocation5 + $0x18] sm:$0xf]
    %v104 = vld [vmem:[#allocation5 + $0x1c] sm:$0xf]
    %v105 = vld [vmem:[#allocation5 + $0x20] sm:$0xf]
    %v106 = vld [vmem:[#allocation5 + $0x24] sm:$0xf]
    %v107 = vld [vmem:[#allocation5 + $0x28] sm:$0xf]
    %v108 = vld [vmem:[#allocation5 + $0x2c] sm:$0xf]
    %v109 = vld [vmem:[#allocation5 + $0x30] sm:$0xf]
    %v110 = vld [vmem:[#allocation5 + $0x34] sm:$0xf]
    %v111 = vld [vmem:[#allocation5 + $0x38] sm:$0xf]
    %v112 = vld [vmem:[#allocation5 + $0x3c] sm:$0xf]
    %v113 = vld [vmem:[#allocation5 + $0x40] sm:$0xf]
    %v114 = vld [vmem:[#allocation5 + $0x44] sm:$0xf]
    %v115 = vld [vmem:[#allocation5 + $0x48] sm:$0xf]
    %v116 = vld [vmem:[#allocation5 + $0x4c] sm:$0xf]
    %v117 = vld [vmem:[#allocation5 + $0x50] sm:$0xf]
    %v118 = vld [vmem:[#allocation5 + $0x54] sm:$0xf]
    %v119 = vld [vmem:[#allocation5 + $0x58] sm:$0xf]
    %v120 = vld [vmem:[#allocation5 + $0x5c] sm:$0xf]
    %v121 = vld [vmem:[#allocation5 + $0x60] sm:$0xf]
    %v122 = vld [vmem:[#allocation5 + $0x64] sm:$0xf]
    %v123 = vld [vmem:[#allocation5 + $0x68] sm:$0xf]
    %v124 = vld [vmem:[#allocation5 + $0x6c] sm:$0xf]
    %v125 = vld [vmem:[#allocation5 + $0x70] sm:$0xf]
    %v126 = vld [vmem:[#allocation5 + $0x74] sm:$0xf]
    %v127 = vld [vmem:[#allocation5 + $0x78] sm:$0xf]
    %v128 = vld [vmem:[#allocation5 + $0x7c] sm:$0xf]
    %v129 = vld [vmem:[#allocation5 + $0x80] sm:$0xf]
    %v130 = vld [vmem:[#allocation5 + $0x84] sm:$0xf]
    %v131 = vld [vmem:[#allocation5 + $0x88] sm:$0xf]
    %v132 = vld [vmem:[#allocation5 + $0x8c] sm:$0xf]
    %v133 = vld [vmem:[#allocation5 + $0x90] sm:$0xf]
    %v134 = vld [vmem:[#allocation5 + $0x94] sm:$0xf]
    %v135 = vld [vmem:[#allocation5 + $0x98] sm:$0xf]
    %v136 = vld [vmem:[#allocation5 + $0x9c] sm:$0xf]
    %v137 = vld [vmem:[#allocation5 + $0xa0] sm:$0xf]
    %v138 = vld [vmem:[#allocation5 + $0xa4] sm:$0xf]
    %v139 = vld [vmem:[#allocation5 + $0xa8] sm:$0xf]
    %v140 = vld [vmem:[#allocation5 + $0xac] sm:$0xf]
    %v141 = vld [vmem:[#allocation5 + $0xb0] sm:$0xf]
    %v142 = vld [vmem:[#allocation5 + $0xb4] sm:$0xf]
    %v143 = vld [vmem:[#allocation5 + $0xb8] sm:$0xf]
    %v144 = vld [vmem:[#allocation5 + $0xbc] sm:$0xf]
    %v145 = vld [vmem:[#allocation5 + $0xc0] sm:$0xf]
    %v146 = vld [vmem:[#allocation5 + $0xc4] sm:$0xf]
    %v147 = vld [vmem:[#allocation5 + $0xc8] sm:$0xf]
    %v148 = vld [vmem:[#allocation5 + $0xcc] sm:$0xf]
    %v149 = vld [vmem:[#allocation5 + $0xd0] sm:$0xf]
    %v150 = vld [vmem:[#allocation5 + $0xd4] sm:$0xf]
    %v151 = vld [vmem:[#allocation5 + $0xd8] sm:$0xf]
    %v152 = vld [vmem:[#allocation5 + $0xdc] sm:$0xf]
    %v153 = vld [vmem:[#allocation5 + $0xe0] sm:$0xf]
    %v154 = vld [vmem:[#allocation5 + $0xe4] sm:$0xf]
    %v155 = vld [vmem:[#allocation5 + $0xe8] sm:$0xf]
    %v156 = vld [vmem:[#allocation5 + $0xec] sm:$0xf]
    %v157 = vld [vmem:[#allocation5 + $0xf0] sm:$0xf]
    %v158 = vld [vmem:[#allocation5 + $0xf4] sm:$0xf]
    %v159 = vld [vmem:[#allocation5 + $0xf8] sm:$0xf]
    %v160 = vld [vmem:[#allocation5 + $0xfc] sm:$0xf]
    %v161 = vld [vmem:[#allocation5 + $0x100] sm:$0xf]
    %v162 = vld [vmem:[#allocation5 + $0x104] sm:$0xf]
    %v163 = vld [vmem:[#allocation5 + $0x108] sm:$0xf]
    %v164 = vld [vmem:[#allocation5 + $0x10c] sm:$0xf]
    %v165 = vld [vmem:[#allocation5 + $0x110] sm:$0xf]
    %v166 = vld [vmem:[#allocation5 + $0x114] sm:$0xf]
    %v167 = vld [vmem:[#allocation5 + $0x118] sm:$0xf]
    %v168 = vld [vmem:[#allocation5 + $0x11c] sm:$0xf]
    %v169 = vld [vmem:[#allocation5 + $0x120] sm:$0xf]
    %v170 = vld [vmem:[#allocation5 + $0x124] sm:$0xf]
    %v171 = vld [vmem:[#allocation5 + $0x128] sm:$0xf]
    %v172 = vld [vmem:[#allocation5 + $0x12c] sm:$0xf]
    %v173 = vld [vmem:[#allocation5 + $0x130] sm:$0xf]
    %v174 = vld [vmem:[#allocation5 + $0x134] sm:$0xf]
    %v175 = vld [vmem:[#allocation5 + $0x138] sm:$0xf]
    %v176 = vld [vmem:[#allocation5 + $0x13c] sm:$0xf]
    %v177 = vld [vmem:[#allocation5 + $0x140] sm:$0xf]
    %v178 = vld [vmem:[#allocation5 + $0x144] sm:$0xf]
    %v179 = vld [vmem:[#allocation5 + $0x148] sm:$0xf]
    %v180 = vld [vmem:[#allocation5 + $0x14c] sm:$0xf]
    %v181 = vld [vmem:[#allocation5 + $0x150] sm:$0xf]
    %v182 = vld [vmem:[#allocation5 + $0x154] sm:$0xf]
    %v183 = vld [vmem:[#allocation5 + $0x158] sm:$0xf]
    %v184 = vld [vmem:[#allocation5 + $0x15c] sm:$0xf]
    %v185 = vld [vmem:[#allocation5 + $0x160] sm:$0xf]
    %v186 = vld [vmem:[#allocation5 + $0x164] sm:$0xf]
    %v187 = vld [vmem:[#allocation5 + $0x168] sm:$0xf]
    %v188 = vld [vmem:[#allocation5 + $0x16c] sm:$0xf]
    %v189 = vld [vmem:[#allocation5 + $0x170] sm:$0xf]
    %v190 = vld [vmem:[#allocation5 + $0x174] sm:$0xf]
    %v191 = vld [vmem:[#allocation5 + $0x178] sm:$0xf]
    %v192 = vld [vmem:[#allocation5 + $0x17c] sm:$0xf]
    %v193 = vld [vmem:[#allocation5 + $0x180] sm:$0xf]
    %v194 = vld [vmem:[#allocation5 + $0x184] sm:$0xf]
    %v195 = vld [vmem:[#allocation5 + $0x188] sm:$0xf]
    %v196 = vld [vmem:[#allocation5 + $0x18c] sm:$0xf]
    %v197 = vld [vmem:[#allocation5 + $0x190] sm:$0xf]
    %v198 = vld [vmem:[#allocation5 + $0x194] sm:$0xf]
    %v199 = vld [vmem:[#allocation5 + $0x198] sm:$0xf]
    %v200 = vld [vmem:[#allocation5 + $0x19c] sm:$0xf]
    %v201 = vld [vmem:[#allocation5 + $0x1a0] sm:$0xf]
    %v202 = vld [vmem:[#allocation5 + $0x1a4] sm:$0xf]
    %v203 = vld [vmem:[#allocation5 + $0x1a8] sm:$0xf]
    %v204 = vld [vmem:[#allocation5 + $0x1ac] sm:$0xf]
    %v205 = vld [vmem:[#allocation5 + $0x1b0] sm:$0xf]
    %v206 = vld [vmem:[#allocation5 + $0x1b4] sm:$0xf]
    %v207 = vld [vmem:[#allocation5 + $0x1b8] sm:$0xf]
    %v208 = vld [vmem:[#allocation5 + $0x1bc] sm:$0xf]
    %v209 = vld [vmem:[#allocation5 + $0x1c0] sm:$0xf]
    %v210 = vld [vmem:[#allocation5 + $0x1c4] sm:$0xf]
    %v211 = vld [vmem:[#allocation5 + $0x1c8] sm:$0xf]
    %v212 = vld [vmem:[#allocation5 + $0x1cc] sm:$0xf]
    %v213 = vld [vmem:[#allocation5 + $0x1d0] sm:$0xf]
    %v214 = vld [vmem:[#allocation5 + $0x1d4] sm:$0xf]
    %v215 = vld [vmem:[#allocation5 + $0x1d8] sm:$0xf]
    %v216 = vld [vmem:[#allocation5 + $0x1dc] sm:$0xf]
    %v217 = vld [vmem:[#allocation5 + $0x1e0] sm:$0xf]
    %v218 = vld [vmem:[#allocation5 + $0x1e4] sm:$0xf]
    %v219 = vld [vmem:[#allocation5 + $0x1e8] sm:$0xf]
    %v220 = vld [vmem:[#allocation5 + $0x1ec] sm:$0xf]
    %v221 = vld [vmem:[#allocation5 + $0x1f0] sm:$0xf]
    %v222 = vld [vmem:[#allocation5 + $0x1f4] sm:$0xf]
    %v223 = vld [vmem:[#allocation5 + $0x1f8] sm:$0xf]
    %v224 = vld [vmem:[#allocation5 + $0x1fc] sm:$0xf]
    %v225 = vld [vmem:[#allocation5 + $0x200] sm:$0xf]
    %v226 = vld [vmem:[#allocation5 + $0x204] sm:$0xf]
    %v227 = vld [vmem:[#allocation5 + $0x208] sm:$0xf]
    %v228 = vld [vmem:[#allocation5 + $0x20c] sm:$0xf]
    %v229 = vld [vmem:[#allocation5 + $0x210] sm:$0xf]
    %v230 = vld [vmem:[#allocation5 + $0x214] sm:$0xf]
    %v231 = vld [vmem:[#allocation5 + $0x218] sm:$0xf]
    %v232 = vld [vmem:[#allocation5 + $0x21c] sm:$0xf]
    %v233 = vld [vmem:[#allocation5 + $0x220] sm:$0xf]
    %v234 = vld [vmem:[#allocation5 + $0x224] sm:$0xf]
    %v235 = vld [vmem:[#allocation5 + $0x228] sm:$0xf]
    %v236 = vld [vmem:[#allocation5 + $0x22c] sm:$0xf]
    %v237 = vld [vmem:[#allocation5 + $0x230] sm:$0xf]
    %v238 = vld [vmem:[#allocation5 + $0x234] sm:$0xf]
    %v239 = vld [vmem:[#allocation5 + $0x238] sm:$0xf]
    %v240 = vld [vmem:[#allocation5 + $0x23c] sm:$0xf]
    %v241 = vld [vmem:[#allocation5 + $0x240] sm:$0xf]
    %v242 = vld [vmem:[#allocation5 + $0x244] sm:$0xf]
    %v243 = vld [vmem:[#allocation5 + $0x248] sm:$0xf]
    %v244 = vld [vmem:[#allocation5 + $0x24c] sm:$0xf]
    %v245 = vld [vmem:[#allocation5 + $0x250] sm:$0xf]
    %v246 = vld [vmem:[#allocation5 + $0x254] sm:$0xf]
    %v247 = vld [vmem:[#allocation5 + $0x258] sm:$0xf]
    %v248 = vld [vmem:[#allocation5 + $0x25c] sm:$0xf]
    %v249 = vld [vmem:[#allocation5 + $0x260] sm:$0xf]
    %v250 = vld [vmem:[#allocation5 + $0x264] sm:$0xf]
    %v251 = vld [vmem:[#allocation5 + $0x268] sm:$0xf]
    %v252 = vld [vmem:[#allocation5 + $0x26c] sm:$0xf]
    %v253 = vld [vmem:[#allocation5 + $0x270] sm:$0xf]
    %v254 = vld [vmem:[#allocation5 + $0x274] sm:$0xf]
    %v255 = vld [vmem:[#allocation5 + $0x278] sm:$0xf]
    %v256 = vld [vmem:[#allocation5 + $0x27c] sm:$0xf]
    %v257 = vld [vmem:[#allocation5 + $0x280] sm:$0xf]
    %v258 = vld [vmem:[#allocation5 + $0x284] sm:$0xf]
    %v259 = vld [vmem:[#allocation5 + $0x288] sm:$0xf]
    %v260 = vld [vmem:[#allocation5 + $0x28c] sm:$0xf]
    %v261 = vld [vmem:[#allocation5 + $0x290] sm:$0xf]
    %v262 = vld [vmem:[#allocation5 + $0x294] sm:$0xf]
    %v263 = vld [vmem:[#allocation5 + $0x298] sm:$0xf]
    %v264 = vld [vmem:[#allocation5 + $0x29c] sm:$0xf]
    %v265 = vld [vmem:[#allocation5 + $0x2a0] sm:$0xf]
    %v266 = vld [vmem:[#allocation5 + $0x2a4] sm:$0xf]
    %v267 = vld [vmem:[#allocation5 + $0x2a8] sm:$0xf]
    %v268 = vld [vmem:[#allocation5 + $0x2ac] sm:$0xf]
    %v269 = vld [vmem:[#allocation5 + $0x2b0] sm:$0xf]
    %v270 = vld [vmem:[#allocation5 + $0x2b4] sm:$0xf]
    %v271 = vld [vmem:[#allocation5 + $0x2b8] sm:$0xf]
    %v272 = vld [vmem:[#allocation5 + $0x2bc] sm:$0xf]
    %v273 = vld [vmem:[#allocation5 + $0x2c0] sm:$0xf]
    %v274 = vld [vmem:[#allocation5 + $0x2c4] sm:$0xf]
    %v275 = vld [vmem:[#allocation5 + $0x2c8] sm:$0xf]
    %v276 = vld [vmem:[#allocation5 + $0x2cc] sm:$0xf]
    %v277 = vld [vmem:[#allocation5 + $0x2d0] sm:$0xf]
    %v278 = vld [vmem:[#allocation5 + $0x2d4] sm:$0xf]
    %v279 = vld [vmem:[#allocation5 + $0x2d8] sm:$0xf]
    %v280 = vld [vmem:[#allocation5 + $0x2dc] sm:$0xf]
    %v281 = vld [vmem:[#allocation5 + $0x2e0] sm:$0xf]
    %v282 = vld [vmem:[#allocation5 + $0x2e4] sm:$0xf]
    %v283 = vld [vmem:[#allocation5 + $0x2e8] sm:$0xf]
    %v284 = vld [vmem:[#allocation5 + $0x2ec] sm:$0xf]
    %v285 = vld [vmem:[#allocation5 + $0x2f0] sm:$0xf]
    %v286 = vld [vmem:[#allocation5 + $0x2f4] sm:$0xf]
    %v287 = vld [vmem:[#allocation5 + $0x2f8] sm:$0xf]
    %v288 = vld [vmem:[#allocation5 + $0x2fc] sm:$0xf]
    %v289 = vld [vmem:[#allocation5 + $0x300] sm:$0xf]
    %v290 = vld [vmem:[#allocation5 + $0x304] sm:$0xf]
    %v291 = vld [vmem:[#allocation5 + $0x308] sm:$0xf]
    %v292 = vld [vmem:[#allocation5 + $0x30c] sm:$0xf]
    %v293 = vld [vmem:[#allocation5 + $0x310] sm:$0xf]
    %v294 = vld [vmem:[#allocation5 + $0x314] sm:$0xf]
    %v295 = vld [vmem:[#allocation5 + $0x318] sm:$0xf]
    %v296 = vld [vmem:[#allocation5 + $0x31c] sm:$0xf]
    %v297 = vld [vmem:[#allocation5 + $0x320] sm:$0xf]
    %v298 = vld [vmem:[#allocation5 + $0x324] sm:$0xf]
    %v299 = vld [vmem:[#allocation5 + $0x328] sm:$0xf]
    %v300 = vld [vmem:[#allocation5 + $0x32c] sm:$0xf]
    %v301 = vld [vmem:[#allocation5 + $0x330] sm:$0xf]
    %v302 = vld [vmem:[#allocation5 + $0x334] sm:$0xf]
    %v303 = vld [vmem:[#allocation5 + $0x338] sm:$0xf]
    %v304 = vld [vmem:[#allocation5 + $0x33c] sm:$0xf]
    %v305 = vld [vmem:[#allocation5 + $0x340] sm:$0xf]
    %v306 = vld [vmem:[#allocation5 + $0x344] sm:$0xf]
    %v307 = vld [vmem:[#allocation5 + $0x348] sm:$0xf]
    %v308 = vld [vmem:[#allocation5 + $0x34c] sm:$0xf]
    %v309 = vld [vmem:[#allocation5 + $0x350] sm:$0xf]
    %v310 = vld [vmem:[#allocation5 + $0x354] sm:$0xf]
    %v311 = vld [vmem:[#allocation5 + $0x358] sm:$0xf]
    %v312 = vld [vmem:[#allocation5 + $0x35c] sm:$0xf]
    %v313 = vld [vmem:[#allocation5 + $0x360] sm:$0xf]
    %v314 = vld [vmem:[#allocation5 + $0x364] sm:$0xf]
    %v315 = vld [vmem:[#allocation5 + $0x368] sm:$0xf]
    %v316 = vld [vmem:[#allocation5 + $0x36c] sm:$0xf]
    %v317 = vld [vmem:[#allocation5 + $0x370] sm:$0xf]
    %v318 = vld [vmem:[#allocation5 + $0x374] sm:$0xf]
    %v319 = vld [vmem:[#allocation5 + $0x378] sm:$0xf]
    %v320 = vld [vmem:[#allocation5 + $0x37c] sm:$0xf]
    %v321 = vld [vmem:[#allocation5 + $0x380] sm:$0xf]
    %v322 = vld [vmem:[#allocation5 + $0x384] sm:$0xf]
    %v323 = vld [vmem:[#allocation5 + $0x388] sm:$0xf]
    %v324 = vld [vmem:[#allocation5 + $0x38c] sm:$0xf]
    %v325 = vld [vmem:[#allocation5 + $0x390] sm:$0xf]
    %v326 = vld [vmem:[#allocation5 + $0x394] sm:$0xf]
    %v327 = vld [vmem:[#allocation5 + $0x398] sm:$0xf]
    %v328 = vld [vmem:[#allocation5 + $0x39c] sm:$0xf]
    %v329 = vld [vmem:[#allocation5 + $0x3a0] sm:$0xf]
    %v330 = vld [vmem:[#allocation5 + $0x3a4] sm:$0xf]
    %v331 = vld [vmem:[#allocation5 + $0x3a8] sm:$0xf]
    %v332 = vld [vmem:[#allocation5 + $0x3ac] sm:$0xf]
    %v333 = vld [vmem:[#allocation5 + $0x3b0] sm:$0xf]
    %v334 = vld [vmem:[#allocation5 + $0x3b4] sm:$0xf]
    %v335 = vld [vmem:[#allocation5 + $0x3b8] sm:$0xf]
    %v336 = vld [vmem:[#allocation5 + $0x3bc] sm:$0xf]
    %v337 = vld [vmem:[#allocation5 + $0x3c0] sm:$0xf]
    %v338 = vld [vmem:[#allocation5 + $0x3c4] sm:$0xf]
    %v339 = vld [vmem:[#allocation5 + $0x3c8] sm:$0xf]
    %v340 = vld [vmem:[#allocation5 + $0x3cc] sm:$0xf]
    %v341 = vld [vmem:[#allocation5 + $0x3d0] sm:$0xf]
    %v342 = vld [vmem:[#allocation5 + $0x3d4] sm:$0xf]
    %v343 = vld [vmem:[#allocation5 + $0x3d8] sm:$0xf]
    %v344 = vld [vmem:[#allocation5 + $0x3dc] sm:$0xf]
    %v345 = vld [vmem:[#allocation5 + $0x3e0] sm:$0xf]
    %v346 = vld [vmem:[#allocation5 + $0x3e4] sm:$0xf]
    %v347 = vld [vmem:[#allocation5 + $0x3e8] sm:$0xf]
    %v348 = vld [vmem:[#allocation5 + $0x3ec] sm:$0xf]
    %v349 = vld [vmem:[#allocation5 + $0x3f0] sm:$0xf]
    %v350 = vld [vmem:[#allocation5 + $0x3f4] sm:$0xf]
    %v351 = vld [vmem:[#allocation5 + $0x3f8] sm:$0xf]
    %v352 = vld [vmem:[#allocation5 + $0x3fc] sm:$0xf]
    %v353 = vld [vmem:[#allocation5 + $0x400] sm:$0xf]
    %v354 = vld [vmem:[#allocation5 + $0x404] sm:$0xf]
    %v355 = vld [vmem:[#allocation5 + $0x408] sm:$0xf]
    %v356 = vld [vmem:[#allocation5 + $0x40c] sm:$0xf]
    %v357 = vld [vmem:[#allocation5 + $0x410] sm:$0xf]
    %v358 = vld [vmem:[#allocation5 + $0x414] sm:$0xf]
    %v359 = vld [vmem:[#allocation5 + $0x418] sm:$0xf]
    %v360 = vld [vmem:[#allocation5 + $0x41c] sm:$0xf]
    %v361 = vld [vmem:[#allocation5 + $0x420] sm:$0xf]
    %v362 = vld [vmem:[#allocation5 + $0x424] sm:$0xf]
    %v363 = vld [vmem:[#allocation5 + $0x428] sm:$0xf]
    %v364 = vld [vmem:[#allocation5 + $0x42c] sm:$0xf]
    %v365 = vld [vmem:[#allocation5 + $0x430] sm:$0xf]
    %v366 = vld [vmem:[#allocation5 + $0x434] sm:$0xf]
    %v367 = vld [vmem:[#allocation5 + $0x438] sm:$0xf]
    %v368 = vld [vmem:[#allocation5 + $0x43c] sm:$0xf]
    %v369 = vld [vmem:[#allocation5 + $0x440] sm:$0xf]
    %v370 = vld [vmem:[#allocation5 + $0x444] sm:$0xf]
    %v371 = vld [vmem:[#allocation5 + $0x448] sm:$0xf]
    %v372 = vld [vmem:[#allocation5 + $0x44c] sm:$0xf]
    %v373 = vld [vmem:[#allocation5 + $0x450] sm:$0xf]
    %v374 = vld [vmem:[#allocation5 + $0x454] sm:$0xf]
    %v375 = vld [vmem:[#allocation5 + $0x458] sm:$0xf]
    %v376 = vld [vmem:[#allocation5 + $0x45c] sm:$0xf]
    %v377 = vld [vmem:[#allocation5 + $0x460] sm:$0xf]
    %v378 = vld [vmem:[#allocation5 + $0x464] sm:$0xf]
    %v379 = vld [vmem:[#allocation5 + $0x468] sm:$0xf]
    %v380 = vld [vmem:[#allocation5 + $0x46c] sm:$0xf]
    %v381 = vld [vmem:[#allocation5 + $0x470] sm:$0xf]
    %v382 = vld [vmem:[#allocation5 + $0x474] sm:$0xf]
    %v383 = vld [vmem:[#allocation5 + $0x478] sm:$0xf]
    %v384 = vld [vmem:[#allocation5 + $0x47c] sm:$0xf]
    %v385 = vld [vmem:[#allocation5 + $0x480] sm:$0xf]
    %v386 = vld [vmem:[#allocation5 + $0x484] sm:$0xf]
    %v387 = vld [vmem:[#allocation5 + $0x488] sm:$0xf]
    %v388 = vld [vmem:[#allocation5 + $0x48c] sm:$0xf]
    %v389 = vld [vmem:[#allocation5 + $0x490] sm:$0xf]
    %v390 = vld [vmem:[#allocation5 + $0x494] sm:$0xf]
    %v391 = vld [vmem:[#allocation5 + $0x498] sm:$0xf]
    %v392 = vld [vmem:[#allocation5 + $0x49c] sm:$0xf]
    %v393 = vld [vmem:[#allocation5 + $0x4a0] sm:$0xf]
    %v394 = vld [vmem:[#allocation5 + $0x4a4] sm:$0xf]
    %v395 = vld [vmem:[#allocation5 + $0x4a8] sm:$0xf]
    %v396 = vld [vmem:[#allocation5 + $0x4ac] sm:$0xf]
    %v397 = vld [vmem:[#allocation5 + $0x4b0] sm:$0xf]
    %v398 = vld [vmem:[#allocation5 + $0x4b4] sm:$0xf]
    %v399 = vld [vmem:[#allocation5 + $0x4b8] sm:$0xf]
    %v400 = vld [vmem:[#allocation5 + $0x4bc] sm:$0xf]
    %v401 = vld [vmem:[#allocation5 + $0x4c0] sm:$0xf]
    %v402 = vld [vmem:[#allocation5 + $0x4c4] sm:$0xf]
    %v403 = vld [vmem:[#allocation5 + $0x4c8] sm:$0xf]
    %v404 = vld [vmem:[#allocation5 + $0x4cc] sm:$0xf]
    %v405 = vld [vmem:[#allocation5 + $0x4d0] sm:$0xf]
    %v406 = vld [vmem:[#allocation5 + $0x4d4] sm:$0xf]
    %v407 = vld [vmem:[#allocation5 + $0x4d8] sm:$0xf]
    %v408 = vld [vmem:[#allocation5 + $0x4dc] sm:$0xf]
    %v409 = vld [vmem:[#allocation5 + $0x4e0] sm:$0xf]
    %v410 = vld [vmem:[#allocation5 + $0x4e4] sm:$0xf]
    %v411 = vld [vmem:[#allocation5 + $0x4e8] sm:$0xf]
    %v412 = vld [vmem:[#allocation5 + $0x4ec] sm:$0xf]
    %v413 = vld [vmem:[#allocation5 + $0x4f0] sm:$0xf]
    %v414 = vld [vmem:[#allocation5 + $0x4f4] sm:$0xf]
    %v415 = vld [vmem:[#allocation5 + $0x4f8] sm:$0xf]
    %v416 = vld [vmem:[#allocation5 + $0x4fc] sm:$0xf]
    %v417 = vld [vmem:[#allocation5 + $0x500] sm:$0xf]
    %v418 = vld [vmem:[#allocation5 + $0x504] sm:$0xf]
    %v419 = vld [vmem:[#allocation5 + $0x508] sm:$0xf]
    %v420 = vld [vmem:[#allocation5 + $0x50c] sm:$0xf]
    %v421 = vld [vmem:[#allocation5 + $0x510] sm:$0xf]
    %v422 = vld [vmem:[#allocation5 + $0x514] sm:$0xf]
    %v423 = vld [vmem:[#allocation5 + $0x518] sm:$0xf]
    %v424 = vld [vmem:[#allocation5 + $0x51c] sm:$0xf]
    %v425 = vld [vmem:[#allocation5 + $0x520] sm:$0xf]
    %v426 = vld [vmem:[#allocation5 + $0x524] sm:$0xf]
    %v427 = vld [vmem:[#allocation5 + $0x528] sm:$0xf]
    %v428 = vld [vmem:[#allocation5 + $0x52c] sm:$0xf]
    %v429 = vld [vmem:[#allocation5 + $0x530] sm:$0xf]
    %v430 = vld [vmem:[#allocation5 + $0x534] sm:$0xf]
    %v431 = vld [vmem:[#allocation5 + $0x538] sm:$0xf]
    %v432 = vld [vmem:[#allocation5 + $0x53c] sm:$0xf]
    %v433 = vld [vmem:[#allocation5 + $0x540] sm:$0xf]
    %v434 = vld [vmem:[#allocation5 + $0x544] sm:$0xf]
    %v435 = vld [vmem:[#allocation5 + $0x548] sm:$0xf]
    %v436 = vld [vmem:[#allocation5 + $0x54c] sm:$0xf]
    %v437 = vld [vmem:[#allocation5 + $0x550] sm:$0xf]
    %v438 = vld [vmem:[#allocation5 + $0x554] sm:$0xf]
    %v439 = vld [vmem:[#allocation5 + $0x558] sm:$0xf]
    %v440 = vld [vmem:[#allocation5 + $0x55c] sm:$0xf]
    %v441 = vld [vmem:[#allocation5 + $0x560] sm:$0xf]
    %v442 = vld [vmem:[#allocation5 + $0x564] sm:$0xf]
    %v443 = vld [vmem:[#allocation5 + $0x568] sm:$0xf]
    %v444 = vld [vmem:[#allocation5 + $0x56c] sm:$0xf]
    %v445 = vld [vmem:[#allocation5 + $0x570] sm:$0xf]
    %v446 = vld [vmem:[#allocation5 + $0x574] sm:$0xf]
    %v447 = vld [vmem:[#allocation5 + $0x578] sm:$0xf]
    %v448 = vld [vmem:[#allocation5 + $0x57c] sm:$0xf]
    %v449 = vld [vmem:[%s2] sm:$0x1]
    %v451 = vperm.slane %v449, 0
    %v475 = vunpack.c.l.b16 %v75
    %v476 = vunpack.c.h.b16 %v75
    %v477 = vunpack.c.l.b16 %v76
    %v478 = vunpack.c.h.b16 %v76
    %v479 = vunpack.c.l.b16 %v77
    %v480 = vunpack.c.h.b16 %v77
    %v481 = vunpack.c.l.b16 %v78
    %v482 = vunpack.c.h.b16 %v78
    %v483 = vunpack.c.l.b16 %v79
    %v484 = vunpack.c.h.b16 %v79
    %v485 = vunpack.c.l.b16 %v80
    %v486 = vunpack.c.h.b16 %v80
    %v487 = vunpack.c.l.b16 %v81
    %v488 = vunpack.c.h.b16 %v81
    %v489 = vunpack.c.l.b16 %v82
    %v490 = vunpack.c.h.b16 %v82
    %v491 = vunpack.c.l.b16 %v83
    %v492 = vunpack.c.h.b16 %v83
    %v493 = vunpack.c.l.b16 %v84
    %v494 = vunpack.c.h.b16 %v84
    %v495 = vunpack.c.l.b16 %v85
    %v496 = vunpack.c.h.b16 %v85
    %v497 = vunpack.c.l.b16 %v86
    %v498 = vunpack.c.h.b16 %v86
    %v499 = vunpack.c.l.b16 %v87
    %v500 = vunpack.c.h.b16 %v87
    %v501 = vunpack.c.l.b16 %v88
    %v502 = vunpack.c.h.b16 %v88
    %v503 = vunpack.c.l.b16 %v89
    %v504 = vunpack.c.h.b16 %v89
    %v505 = vunpack.c.l.b16 %v90
    %v506 = vunpack.c.h.b16 %v90
    %v507 = vunpack.c.l.b16 %v91
    %v508 = vunpack.c.h.b16 %v91
    %v509 = vunpack.c.l.b16 %v92
    %v510 = vunpack.c.h.b16 %v92
    %v511 = vunpack.c.l.b16 %v93
    %v512 = vunpack.c.h.b16 %v93
    %v513 = vunpack.c.l.b16 %v94
    %v514 = vunpack.c.h.b16 %v94
    %v515 = vunpack.c.l.b16 %v95
    %v516 = vunpack.c.h.b16 %v95
    %v517 = vunpack.c.l.b16 %v96
    %v518 = vunpack.c.h.b16 %v96
    %v519 = vpack.c.b16 %v497, %v475
    %v520 = vpack.c.b16 %v498, %v476
    %v521 = vpack.c.b16 %v499, %v477
    %v522 = vpack.c.b16 %v500, %v478
    %v523 = vpack.c.b16 %v501, %v479
    %v524 = vpack.c.b16 %v502, %v480
    %v525 = vpack.c.b16 %v503, %v481
    %v526 = vpack.c.b16 %v504, %v482
    %v527 = vpack.c.b16 %v505, %v483
    %v528 = vpack.c.b16 %v506, %v484
    %v529 = vpack.c.b16 %v507, %v485
    %v530 = vpack.c.b16 %v508, %v486
    %v531 = vpack.c.b16 %v509, %v487
    %v532 = vpack.c.b16 %v510, %v488
    %v533 = vpack.c.b16 %v511, %v489
    %v534 = vpack.c.b16 %v512, %v490
    %v535 = vpack.c.b16 %v513, %v491
    %v536 = vpack.c.b16 %v514, %v492
    %v537 = vpack.c.b16 %v515, %v493
    %v538 = vpack.c.b16 %v516, %v494
    %v539 = vpack.c.b16 %v517, %v495
    %v540 = vpack.c.b16 %v518, %v496
    %v915 = vunpack.c.l.b16 %v97
    %v916 = vunpack.c.l.b16 %v98
    %v917 = vunpack.c.l.b16 %v99
    %v918 = vunpack.c.l.b16 %v100
    %v919 = vunpack.c.l.b16 %v101
    %v920 = vunpack.c.l.b16 %v102
    %v921 = vunpack.c.l.b16 %v103
    %v922 = vunpack.c.l.b16 %v104
    %v923 = vunpack.c.l.b16 %v105
    %v924 = vunpack.c.l.b16 %v106
    %v925 = vunpack.c.l.b16 %v107
    %v926 = vunpack.c.l.b16 %v108
    %v927 = vunpack.c.l.b16 %v109
    %v928 = vunpack.c.l.b16 %v110
    %v929 = vunpack.c.l.b16 %v111
    %v930 = vunpack.c.l.b16 %v112
    %v931 = vunpack.c.l.b16 %v113
    %v932 = vunpack.c.l.b16 %v114
    %v933 = vunpack.c.l.b16 %v115
    %v934 = vunpack.c.l.b16 %v116
    %v935 = vunpack.c.l.b16 %v117
    %v936 = vunpack.c.l.b16 %v118
    %v937 = vunpack.c.l.b16 %v119
    %v938 = vunpack.c.l.b16 %v120
    %v939 = vunpack.c.l.b16 %v121
    %v940 = vunpack.c.l.b16 %v122
    %v941 = vunpack.c.l.b16 %v123
    %v942 = vunpack.c.l.b16 %v124
    %v943 = vunpack.c.l.b16 %v125
    %v944 = vunpack.c.l.b16 %v126
    %v945 = vunpack.c.l.b16 %v127
    %v946 = vunpack.c.l.b16 %v128
    %v947 = vunpack.c.l.b16 %v129
    %v948 = vunpack.c.l.b16 %v130
    %v949 = vunpack.c.l.b16 %v131
    %v950 = vunpack.c.l.b16 %v132
    %v951 = vunpack.c.l.b16 %v133
    %v952 = vunpack.c.l.b16 %v134
    %v953 = vunpack.c.l.b16 %v135
    %v954 = vunpack.c.l.b16 %v136
    %v955 = vunpack.c.l.b16 %v137
    %v956 = vunpack.c.l.b16 %v138
    %v957 = vunpack.c.l.b16 %v139
    %v958 = vunpack.c.l.b16 %v140
    %v959 = vunpack.c.l.b16 %v141
    %v960 = vunpack.c.l.b16 %v142
    %v961 = vunpack.c.l.b16 %v143
    %v962 = vunpack.c.l.b16 %v144
    %v963 = vunpack.c.l.b16 %v145
    %v964 = vunpack.c.l.b16 %v146
    %v965 = vunpack.c.l.b16 %v147
    %v966 = vunpack.c.l.b16 %v148
    %v967 = vunpack.c.l.b16 %v149
    %v968 = vunpack.c.l.b16 %v150
    %v969 = vunpack.c.l.b16 %v151
    %v970 = vunpack.c.l.b16 %v152
    %v971 = vunpack.c.l.b16 %v153
    %v972 = vunpack.c.l.b16 %v154
    %v973 = vunpack.c.l.b16 %v155
    %v974 = vunpack.c.l.b16 %v156
    %v975 = vunpack.c.l.b16 %v157
    %v976 = vunpack.c.l.b16 %v158
    %v977 = vunpack.c.l.b16 %v159
    %v978 = vunpack.c.l.b16 %v160
    %v979 = vunpack.c.l.b16 %v161
    %v980 = vunpack.c.l.b16 %v162
    %v981 = vunpack.c.l.b16 %v163
    %v982 = vunpack.c.l.b16 %v164
    %v983 = vunpack.c.l.b16 %v165
    %v984 = vunpack.c.l.b16 %v166
    %v985 = vunpack.c.l.b16 %v167
    %v986 = vunpack.c.l.b16 %v168
    %v987 = vunpack.c.l.b16 %v169
    %v988 = vunpack.c.l.b16 %v170
    %v989 = vunpack.c.l.b16 %v171
    %v990 = vunpack.c.l.b16 %v172
    %v991 = vunpack.c.l.b16 %v173
    %v992 = vunpack.c.l.b16 %v174
    %v993 = vunpack.c.l.b16 %v175
    %v994 = vunpack.c.l.b16 %v176
    %v995 = vunpack.c.l.b16 %v177
    %v996 = vunpack.c.l.b16 %v178
    %v997 = vunpack.c.l.b16 %v179
    %v998 = vunpack.c.l.b16 %v180
    %v999 = vunpack.c.l.b16 %v181
    %v1000 = vunpack.c.l.b16 %v182
    %v1001 = vunpack.c.l.b16 %v183
    %v1002 = vunpack.c.l.b16 %v184
    %v1003 = vunpack.c.l.b16 %v185
    %v1004 = vunpack.c.l.b16 %v186
    %v1005 = vunpack.c.l.b16 %v187
    %v1006 = vunpack.c.l.b16 %v188
    %v1007 = vunpack.c.l.b16 %v189
    %v1008 = vunpack.c.l.b16 %v190
    %v1009 = vunpack.c.l.b16 %v191
    %v1010 = vunpack.c.l.b16 %v192
    %v1011 = vunpack.c.l.b16 %v193
    %v1012 = vunpack.c.l.b16 %v194
    %v1013 = vunpack.c.l.b16 %v195
    %v1014 = vunpack.c.l.b16 %v196
    %v1015 = vunpack.c.l.b16 %v197
    %v1016 = vunpack.c.l.b16 %v198
    %v1017 = vunpack.c.l.b16 %v199
    %v1018 = vunpack.c.l.b16 %v200
    %v1019 = vunpack.c.l.b16 %v201
    %v1020 = vunpack.c.l.b16 %v202
    %v1021 = vunpack.c.l.b16 %v203
    %v1022 = vunpack.c.l.b16 %v204
    %v1023 = vunpack.c.l.b16 %v205
    %v1024 = vunpack.c.l.b16 %v206
    %v1025 = vunpack.c.l.b16 %v207
    %v1026 = vunpack.c.l.b16 %v208
    %v1027 = vunpack.c.l.b16 %v209
    %v1028 = vunpack.c.l.b16 %v210
    %v1029 = vunpack.c.l.b16 %v211
    %v1030 = vunpack.c.l.b16 %v212
    %v1031 = vunpack.c.l.b16 %v213
    %v1032 = vunpack.c.l.b16 %v214
    %v1033 = vunpack.c.l.b16 %v215
    %v1034 = vunpack.c.l.b16 %v216
    %v1035 = vunpack.c.l.b16 %v217
    %v1036 = vunpack.c.l.b16 %v218
    %v1037 = vunpack.c.l.b16 %v219
    %v1038 = vunpack.c.l.b16 %v220
    %v1039 = vunpack.c.l.b16 %v221
    %v1040 = vunpack.c.l.b16 %v222
    %v1041 = vunpack.c.l.b16 %v223
    %v1042 = vunpack.c.l.b16 %v224
    %v1043 = vunpack.c.l.b16 %v225
    %v1044 = vunpack.c.l.b16 %v226
    %v1045 = vunpack.c.l.b16 %v227
    %v1046 = vunpack.c.l.b16 %v228
    %v1047 = vunpack.c.l.b16 %v229
    %v1048 = vunpack.c.l.b16 %v230
    %v1049 = vunpack.c.l.b16 %v231
    %v1050 = vunpack.c.l.b16 %v232
    %v1051 = vunpack.c.l.b16 %v233
    %v1052 = vunpack.c.l.b16 %v234
    %v1053 = vunpack.c.l.b16 %v235
    %v1054 = vunpack.c.l.b16 %v236
    %v1055 = vunpack.c.l.b16 %v237
    %v1056 = vunpack.c.l.b16 %v238
    %v1057 = vunpack.c.l.b16 %v239
    %v1058 = vunpack.c.l.b16 %v240
    %v1059 = vunpack.c.l.b16 %v241
    %v1060 = vunpack.c.l.b16 %v242
    %v1061 = vunpack.c.l.b16 %v243
    %v1062 = vunpack.c.l.b16 %v244
    %v1063 = vunpack.c.l.b16 %v245
    %v1064 = vunpack.c.l.b16 %v246
    %v1065 = vunpack.c.l.b16 %v247
    %v1066 = vunpack.c.l.b16 %v248
    %v1067 = vunpack.c.l.b16 %v249
    %v1068 = vunpack.c.l.b16 %v250
    %v1069 = vunpack.c.l.b16 %v251
    %v1070 = vunpack.c.l.b16 %v252
    %v1071 = vunpack.c.l.b16 %v253
    %v1072 = vunpack.c.l.b16 %v254
    %v1073 = vunpack.c.l.b16 %v255
    %v1074 = vunpack.c.l.b16 %v256
    %v1075 = vunpack.c.l.b16 %v257
    %v1076 = vunpack.c.l.b16 %v258
    %v1077 = vunpack.c.l.b16 %v259
    %v1078 = vunpack.c.l.b16 %v260
    %v1079 = vunpack.c.l.b16 %v261
    %v1080 = vunpack.c.l.b16 %v262
    %v1081 = vunpack.c.l.b16 %v263
    %v1082 = vunpack.c.l.b16 %v264
    %v1083 = vunpack.c.l.b16 %v265
    %v1084 = vunpack.c.l.b16 %v266
    %v1085 = vunpack.c.l.b16 %v267
    %v1086 = vunpack.c.l.b16 %v268
    %v1087 = vunpack.c.l.b16 %v269
    %v1088 = vunpack.c.l.b16 %v270
    %v1089 = vunpack.c.l.b16 %v271
    %v1090 = vunpack.c.l.b16 %v272
    %v1091 = vunpack.c.l.b16 %v273
    %v1092 = vunpack.c.l.b16 %v274
    %v1093 = vunpack.c.l.b16 %v275
    %v1094 = vunpack.c.l.b16 %v276
    %v1095 = vunpack.c.l.b16 %v277
    %v1096 = vunpack.c.l.b16 %v278
    %v1097 = vunpack.c.l.b16 %v279
    %v1098 = vunpack.c.l.b16 %v280
    %v1099 = vunpack.c.l.b16 %v281
    %v1100 = vunpack.c.l.b16 %v282
    %v1101 = vunpack.c.l.b16 %v283
    %v1102 = vunpack.c.l.b16 %v284
    %v1103 = vunpack.c.l.b16 %v285
    %v1104 = vunpack.c.l.b16 %v286
    %v1105 = vunpack.c.l.b16 %v287
    %v1106 = vunpack.c.l.b16 %v288
    %v1107 = vunpack.c.l.b16 %v289
    %v1108 = vunpack.c.l.b16 %v290
    %v1109 = vunpack.c.l.b16 %v291
    %v1110 = vunpack.c.l.b16 %v292
    %v1111 = vunpack.c.l.b16 %v293
    %v1112 = vunpack.c.l.b16 %v294
    %v1113 = vunpack.c.l.b16 %v295
    %v1114 = vunpack.c.l.b16 %v296
    %v1115 = vunpack.c.l.b16 %v297
    %v1116 = vunpack.c.l.b16 %v298
    %v1117 = vunpack.c.l.b16 %v299
    %v1118 = vunpack.c.l.b16 %v300
    %v1119 = vunpack.c.l.b16 %v301
    %v1120 = vunpack.c.l.b16 %v302
    %v1121 = vunpack.c.l.b16 %v303
    %v1122 = vunpack.c.l.b16 %v304
    %v1123 = vunpack.c.l.b16 %v305
    %v1124 = vunpack.c.l.b16 %v306
    %v1125 = vunpack.c.l.b16 %v307
    %v1126 = vunpack.c.l.b16 %v308
    %v1127 = vunpack.c.l.b16 %v309
    %v1128 = vunpack.c.l.b16 %v310
    %v1129 = vunpack.c.l.b16 %v311
    %v1130 = vunpack.c.l.b16 %v312
    %v1131 = vunpack.c.l.b16 %v313
    %v1132 = vunpack.c.l.b16 %v314
    %v1133 = vunpack.c.l.b16 %v315
    %v1134 = vunpack.c.l.b16 %v316
    %v1135 = vunpack.c.l.b16 %v317
    %v1136 = vunpack.c.l.b16 %v318
    %v1137 = vunpack.c.l.b16 %v319
    %v1138 = vunpack.c.l.b16 %v320
    %v1139 = vunpack.c.l.b16 %v321
    %v1140 = vunpack.c.l.b16 %v322
    %v1141 = vunpack.c.l.b16 %v323
    %v1142 = vunpack.c.l.b16 %v324
    %v1143 = vunpack.c.l.b16 %v325
    %v1144 = vunpack.c.l.b16 %v326
    %v1145 = vunpack.c.l.b16 %v327
    %v1146 = vunpack.c.l.b16 %v328
    %v1147 = vunpack.c.l.b16 %v329
    %v1148 = vunpack.c.l.b16 %v330
    %v1149 = vunpack.c.l.b16 %v331
    %v1150 = vunpack.c.l.b16 %v332
    %v1151 = vunpack.c.l.b16 %v333
    %v1152 = vunpack.c.l.b16 %v334
    %v1153 = vunpack.c.l.b16 %v335
    %v1154 = vunpack.c.l.b16 %v336
    %v1155 = vunpack.c.l.b16 %v337
    %v1156 = vunpack.c.l.b16 %v338
    %v1157 = vunpack.c.l.b16 %v339
    %v1158 = vunpack.c.l.b16 %v340
    %v1159 = vunpack.c.l.b16 %v341
    %v1160 = vunpack.c.l.b16 %v342
    %v1161 = vunpack.c.l.b16 %v343
    %v1162 = vunpack.c.l.b16 %v344
    %v1163 = vunpack.c.l.b16 %v345
    %v1164 = vunpack.c.l.b16 %v346
    %v1165 = vunpack.c.l.b16 %v347
    %v1166 = vunpack.c.l.b16 %v348
    %v1167 = vunpack.c.l.b16 %v349
    %v1168 = vunpack.c.l.b16 %v350
    %v1169 = vunpack.c.l.b16 %v351
    %v1170 = vunpack.c.l.b16 %v352
    %v1171 = vunpack.c.l.b16 %v353
    %v1172 = vunpack.c.l.b16 %v354
    %v1173 = vunpack.c.l.b16 %v355
    %v1174 = vunpack.c.l.b16 %v356
    %v1175 = vunpack.c.l.b16 %v357
    %v1176 = vunpack.c.l.b16 %v358
    %v1177 = vunpack.c.l.b16 %v359
    %v1178 = vunpack.c.l.b16 %v360
    %v1179 = vunpack.c.l.b16 %v361
    %v1180 = vunpack.c.l.b16 %v362
    %v1181 = vunpack.c.l.b16 %v363
    %v1182 = vunpack.c.l.b16 %v364
    %v1183 = vunpack.c.l.b16 %v365
    %v1184 = vunpack.c.l.b16 %v366
    %v1185 = vunpack.c.l.b16 %v367
    %v1186 = vunpack.c.l.b16 %v368
    %v1187 = vunpack.c.l.b16 %v369
    %v1188 = vunpack.c.l.b16 %v370
    %v1189 = vunpack.c.l.b16 %v371
    %v1190 = vunpack.c.l.b16 %v372
    %v1191 = vunpack.c.l.b16 %v373
    %v1192 = vunpack.c.l.b16 %v374
    %v1193 = vunpack.c.l.b16 %v375
    %v1194 = vunpack.c.l.b16 %v376
    %v1195 = vunpack.c.l.b16 %v377
    %v1196 = vunpack.c.l.b16 %v378
    %v1197 = vunpack.c.l.b16 %v379
    %v1198 = vunpack.c.l.b16 %v380
    %v1199 = vunpack.c.l.b16 %v381
    %v1200 = vunpack.c.l.b16 %v382
    %v1201 = vunpack.c.l.b16 %v383
    %v1202 = vunpack.c.l.b16 %v384
    %v1203 = vunpack.c.l.b16 %v385
    %v1204 = vunpack.c.l.b16 %v386
    %v1205 = vunpack.c.l.b16 %v387
    %v1206 = vunpack.c.l.b16 %v388
    %v1207 = vunpack.c.l.b16 %v389
    %v1208 = vunpack.c.l.b16 %v390
    %v1209 = vunpack.c.l.b16 %v391
    %v1210 = vunpack.c.l.b16 %v392
    %v1211 = vunpack.c.l.b16 %v393
    %v1212 = vunpack.c.l.b16 %v394
    %v1213 = vunpack.c.l.b16 %v395
    %v1214 = vunpack.c.l.b16 %v396
    %v1215 = vunpack.c.l.b16 %v397
    %v1216 = vunpack.c.l.b16 %v398
    %v1217 = vunpack.c.l.b16 %v399
    %v1218 = vunpack.c.l.b16 %v400
    %v1219 = vunpack.c.l.b16 %v401
    %v1220 = vunpack.c.l.b16 %v402
    %v1221 = vunpack.c.l.b16 %v403
    %v1222 = vunpack.c.l.b16 %v404
    %v1223 = vunpack.c.l.b16 %v405
    %v1224 = vunpack.c.l.b16 %v406
    %v1225 = vunpack.c.l.b16 %v407
    %v1226 = vunpack.c.l.b16 %v408
    %v1227 = vunpack.c.l.b16 %v409
    %v1228 = vunpack.c.l.b16 %v410
    %v1229 = vunpack.c.l.b16 %v411
    %v1230 = vunpack.c.l.b16 %v412
    %v1231 = vunpack.c.l.b16 %v413
    %v1232 = vunpack.c.l.b16 %v414
    %v1233 = vunpack.c.l.b16 %v415
    %v1234 = vunpack.c.l.b16 %v416
    %v1235 = vunpack.c.l.b16 %v417
    %v1236 = vunpack.c.l.b16 %v418
    %v1237 = vunpack.c.l.b16 %v419
    %v1238 = vunpack.c.l.b16 %v420
    %v1239 = vunpack.c.l.b16 %v421
    %v1240 = vunpack.c.l.b16 %v422
    %v1241 = vunpack.c.l.b16 %v423
    %v1242 = vunpack.c.l.b16 %v424
    %v1243 = vunpack.c.l.b16 %v425
    %v1244 = vunpack.c.l.b16 %v426
    %v1245 = vunpack.c.l.b16 %v427
    %v1246 = vunpack.c.l.b16 %v428
    %v1247 = vunpack.c.l.b16 %v429
    %v1248 = vunpack.c.l.b16 %v430
    %v1249 = vunpack.c.l.b16 %v431
    %v1250 = vunpack.c.l.b16 %v432
    %v1251 = vunpack.c.l.b16 %v433
    %v1252 = vunpack.c.l.b16 %v434
    %v1253 = vunpack.c.l.b16 %v435
    %v1254 = vunpack.c.l.b16 %v436
    %v1255 = vunpack.c.l.b16 %v437
    %v1256 = vunpack.c.l.b16 %v438
    %v1257 = vunpack.c.l.b16 %v439
    %v1258 = vunpack.c.l.b16 %v440
    %v1259 = vunpack.c.l.b16 %v441
    %v1260 = vunpack.c.l.b16 %v442
    %v1261 = vunpack.c.l.b16 %v443
    %v1262 = vunpack.c.l.b16 %v444
    %v1263 = vunpack.c.l.b16 %v445
    %v1264 = vunpack.c.l.b16 %v446
    %v1265 = vunpack.c.l.b16 %v447
    %v1266 = vunpack.c.l.b16 %v448
    %v1267 = vpack.c.b16 %v916, %v915
    %v1268 = vpack.c.b16 %v918, %v917
    %v1269 = vpack.c.b16 %v920, %v919
    %v1270 = vpack.c.b16 %v922, %v921
    %v1271 = vpack.c.b16 %v924, %v923
    %v1272 = vpack.c.b16 %v926, %v925
    %v1273 = vpack.c.b16 %v928, %v927
    %v1274 = vpack.c.b16 %v930, %v929
    %v1275 = vpack.c.b16 %v932, %v931
    %v1276 = vpack.c.b16 %v934, %v933
    %v1277 = vpack.c.b16 %v936, %v935
    %v1278 = vpack.c.b16 %v938, %v937
    %v1279 = vpack.c.b16 %v940, %v939
    %v1280 = vpack.c.b16 %v942, %v941
    %v1281 = vpack.c.b16 %v944, %v943
    %v1282 = vpack.c.b16 %v946, %v945
    %v1283 = vpack.c.b16 %v948, %v947
    %v1284 = vpack.c.b16 %v950, %v949
    %v1285 = vpack.c.b16 %v952, %v951
    %v1286 = vpack.c.b16 %v954, %v953
    %v1287 = vpack.c.b16 %v956, %v955
    %v1288 = vpack.c.b16 %v958, %v957
    %v1289 = vpack.c.b16 %v960, %v959
    %v1290 = vpack.c.b16 %v962, %v961
    %v1291 = vpack.c.b16 %v964, %v963
    %v1292 = vpack.c.b16 %v966, %v965
    %v1293 = vpack.c.b16 %v968, %v967
    %v1294 = vpack.c.b16 %v970, %v969
    %v1295 = vpack.c.b16 %v972, %v971
    %v1296 = vpack.c.b16 %v974, %v973
    %v1297 = vpack.c.b16 %v976, %v975
    %v1298 = vpack.c.b16 %v978, %v977
    %v1299 = vpack.c.b16 %v980, %v979
    %v1300 = vpack.c.b16 %v982, %v981
    %v1301 = vpack.c.b16 %v984, %v983
    %v1302 = vpack.c.b16 %v986, %v985
    %v1303 = vpack.c.b16 %v988, %v987
    %v1304 = vpack.c.b16 %v990, %v989
    %v1305 = vpack.c.b16 %v992, %v991
    %v1306 = vpack.c.b16 %v994, %v993
    %v1307 = vpack.c.b16 %v996, %v995
    %v1308 = vpack.c.b16 %v998, %v997
    %v1309 = vpack.c.b16 %v1000, %v999
    %v1310 = vpack.c.b16 %v1002, %v1001
    %v1311 = vpack.c.b16 %v1004, %v1003
    %v1312 = vpack.c.b16 %v1006, %v1005
    %v1313 = vpack.c.b16 %v1008, %v1007
    %v1314 = vpack.c.b16 %v1010, %v1009
    %v1315 = vpack.c.b16 %v1012, %v1011
    %v1316 = vpack.c.b16 %v1014, %v1013
    %v1317 = vpack.c.b16 %v1016, %v1015
    %v1318 = vpack.c.b16 %v1018, %v1017
    %v1319 = vpack.c.b16 %v1020, %v1019
    %v1320 = vpack.c.b16 %v1022, %v1021
    %v1321 = vpack.c.b16 %v1024, %v1023
    %v1322 = vpack.c.b16 %v1026, %v1025
    %v1323 = vpack.c.b16 %v1028, %v1027
    %v1324 = vpack.c.b16 %v1030, %v1029
    %v1325 = vpack.c.b16 %v1032, %v1031
    %v1326 = vpack.c.b16 %v1034, %v1033
    %v1327 = vpack.c.b16 %v1036, %v1035
    %v1328 = vpack.c.b16 %v1038, %v1037
    %v1329 = vpack.c.b16 %v1040, %v1039
    %v1330 = vpack.c.b16 %v1042, %v1041
    %v1331 = vpack.c.b16 %v1044, %v1043
    %v1332 = vpack.c.b16 %v1046, %v1045
    %v1333 = vpack.c.b16 %v1048, %v1047
    %v1334 = vpack.c.b16 %v1050, %v1049
    %v1335 = vpack.c.b16 %v1052, %v1051
    %v1336 = vpack.c.b16 %v1054, %v1053
    %v1337 = vpack.c.b16 %v1056, %v1055
    %v1338 = vpack.c.b16 %v1058, %v1057
    %v1339 = vpack.c.b16 %v1060, %v1059
    %v1340 = vpack.c.b16 %v1062, %v1061
    %v1341 = vpack.c.b16 %v1064, %v1063
    %v1342 = vpack.c.b16 %v1066, %v1065
    %v1343 = vpack.c.b16 %v1068, %v1067
    %v1344 = vpack.c.b16 %v1070, %v1069
    %v1345 = vpack.c.b16 %v1072, %v1071
    %v1346 = vpack.c.b16 %v1074, %v1073
    %v1347 = vpack.c.b16 %v1076, %v1075
    %v1348 = vpack.c.b16 %v1078, %v1077
    %v1349 = vpack.c.b16 %v1080, %v1079
    %v1350 = vpack.c.b16 %v1082, %v1081
    %v1351 = vpack.c.b16 %v1084, %v1083
    %v1352 = vpack.c.b16 %v1086, %v1085
    %v1353 = vpack.c.b16 %v1088, %v1087
    %v1354 = vpack.c.b16 %v1090, %v1089
    %v1355 = vpack.c.b16 %v1092, %v1091
    %v1356 = vpack.c.b16 %v1094, %v1093
    %v1357 = vpack.c.b16 %v1096, %v1095
    %v1358 = vpack.c.b16 %v1098, %v1097
    %v1359 = vpack.c.b16 %v1100, %v1099
    %v1360 = vpack.c.b16 %v1102, %v1101
    %v1361 = vpack.c.b16 %v1104, %v1103
    %v1362 = vpack.c.b16 %v1106, %v1105
    %v1363 = vpack.c.b16 %v1108, %v1107
    %v1364 = vpack.c.b16 %v1110, %v1109
    %v1365 = vpack.c.b16 %v1112, %v1111
    %v1366 = vpack.c.b16 %v1114, %v1113
    %v1367 = vpack.c.b16 %v1116, %v1115
    %v1368 = vpack.c.b16 %v1118, %v1117
    %v1369 = vpack.c.b16 %v1120, %v1119
    %v1370 = vpack.c.b16 %v1122, %v1121
    %v1371 = vpack.c.b16 %v1124, %v1123
    %v1372 = vpack.c.b16 %v1126, %v1125
    %v1373 = vpack.c.b16 %v1128, %v1127
    %v1374 = vpack.c.b16 %v1130, %v1129
    %v1375 = vpack.c.b16 %v1132, %v1131
    %v1376 = vpack.c.b16 %v1134, %v1133
    %v1377 = vpack.c.b16 %v1136, %v1135
    %v1378 = vpack.c.b16 %v1138, %v1137
    %v1379 = vpack.c.b16 %v1140, %v1139
    %v1380 = vpack.c.b16 %v1142, %v1141
    %v1381 = vpack.c.b16 %v1144, %v1143
    %v1382 = vpack.c.b16 %v1146, %v1145
    %v1383 = vpack.c.b16 %v1148, %v1147
    %v1384 = vpack.c.b16 %v1150, %v1149
    %v1385 = vpack.c.b16 %v1152, %v1151
    %v1386 = vpack.c.b16 %v1154, %v1153
    %v1387 = vpack.c.b16 %v1156, %v1155
    %v1388 = vpack.c.b16 %v1158, %v1157
    %v1389 = vpack.c.b16 %v1160, %v1159
    %v1390 = vpack.c.b16 %v1162, %v1161
    %v1391 = vpack.c.b16 %v1164, %v1163
    %v1392 = vpack.c.b16 %v1166, %v1165
    %v1393 = vpack.c.b16 %v1168, %v1167
    %v1394 = vpack.c.b16 %v1170, %v1169
    %v1395 = vpack.c.b16 %v1172, %v1171
    %v1396 = vpack.c.b16 %v1174, %v1173
    %v1397 = vpack.c.b16 %v1176, %v1175
    %v1398 = vpack.c.b16 %v1178, %v1177
    %v1399 = vpack.c.b16 %v1180, %v1179
    %v1400 = vpack.c.b16 %v1182, %v1181
    %v1401 = vpack.c.b16 %v1184, %v1183
    %v1402 = vpack.c.b16 %v1186, %v1185
    %v1403 = vpack.c.b16 %v1188, %v1187
    %v1404 = vpack.c.b16 %v1190, %v1189
    %v1405 = vpack.c.b16 %v1192, %v1191
    %v1406 = vpack.c.b16 %v1194, %v1193
    %v1407 = vpack.c.b16 %v1196, %v1195
    %v1408 = vpack.c.b16 %v1198, %v1197
    %v1409 = vpack.c.b16 %v1200, %v1199
    %v1410 = vpack.c.b16 %v1202, %v1201
    %v1411 = vpack.c.b16 %v1204, %v1203
    %v1412 = vpack.c.b16 %v1206, %v1205
    %v1413 = vpack.c.b16 %v1208, %v1207
    %v1414 = vpack.c.b16 %v1210, %v1209
    %v1415 = vpack.c.b16 %v1212, %v1211
    %v1416 = vpack.c.b16 %v1214, %v1213
    %v1417 = vpack.c.b16 %v1216, %v1215
    %v1418 = vpack.c.b16 %v1218, %v1217
    %v1419 = vpack.c.b16 %v1220, %v1219
    %v1420 = vpack.c.b16 %v1222, %v1221
    %v1421 = vpack.c.b16 %v1224, %v1223
    %v1422 = vpack.c.b16 %v1226, %v1225
    %v1423 = vpack.c.b16 %v1228, %v1227
    %v1424 = vpack.c.b16 %v1230, %v1229
    %v1425 = vpack.c.b16 %v1232, %v1231
    %v1426 = vpack.c.b16 %v1234, %v1233
    %v1427 = vpack.c.b16 %v1236, %v1235
    %v1428 = vpack.c.b16 %v1238, %v1237
    %v1429 = vpack.c.b16 %v1240, %v1239
    %v1430 = vpack.c.b16 %v1242, %v1241
    %v1431 = vpack.c.b16 %v1244, %v1243
    %v1432 = vpack.c.b16 %v1246, %v1245
    %v1433 = vpack.c.b16 %v1248, %v1247
    %v1434 = vpack.c.b16 %v1250, %v1249
    %v1435 = vpack.c.b16 %v1252, %v1251
    %v1436 = vpack.c.b16 %v1254, %v1253
    %v1437 = vpack.c.b16 %v1256, %v1255
    %v1438 = vpack.c.b16 %v1258, %v1257
    %v1439 = vpack.c.b16 %v1260, %v1259
    %v1440 = vpack.c.b16 %v1262, %v1261
    %v1441 = vpack.c.b16 %v1264, %v1263
    %v1442 = vpack.c.b16 %v1266, %v1265
    %1619 = vmatpush.bf16.msra.mxu0 %v1274
    %1620 = vmatpush.bf16.msra.mxu0 %v1273
    %1621 = vmatpush.bf16.msra.mxu0 %v1272
    %1622 = vmatpush.bf16.msra.mxu0 %v1271
    %1623 = vmatpush.bf16.msra.mxu0 %v1270
    %1624 = vmatpush.bf16.msra.mxu0 %v1269
    %1625 = vmatpush.bf16.msra.mxu0 %v1268
    %1626 = vmatpush.bf16.msra.mxu0 %v1267
    %1627 = vmatmul.bf16.gmra.mxu0 %v519
    %v1628 = vpop.f32.mrf.mxu0
    %v1629 = vadd.f32 %v451, %v1628
    %v1630 = vpop.f32.mrf.mxu0
    %v1631 = vadd.f32 %v451, %v1630
    %1632 = vdwg.mxu0
    %1633 = vmatpush.bf16.msra.mxu0 %v1282
    %1634 = vmatpush.bf16.msra.mxu0 %v1281
    %1635 = vmatpush.bf16.msra.mxu0 %v1280
    %1636 = vmatpush.bf16.msra.mxu0 %v1279
    %1637 = vmatpush.bf16.msra.mxu0 %v1278
    %1638 = vmatpush.bf16.msra.mxu0 %v1277
    %1639 = vmatpush.bf16.msra.mxu0 %v1276
    %1640 = vmatpush.bf16.msra.mxu0 %v1275
    %1641 = vmatmul.bf16.gmra.mxu0 %v520
    %v1642 = vpop.f32.mrf.mxu0
    %v1643 = vadd.f32 %v1629, %v1642
    %v1644 = vpop.f32.mrf.mxu0
    %v1645 = vadd.f32 %v1631, %v1644
    %1646 = vdwg.mxu0
    %1647 = vmatpush.bf16.msra.mxu0 %v1290
    %1648 = vmatpush.bf16.msra.mxu0 %v1289
    %1649 = vmatpush.bf16.msra.mxu0 %v1288
    %1650 = vmatpush.bf16.msra.mxu0 %v1287
    %1651 = vmatpush.bf16.msra.mxu0 %v1286
    %1652 = vmatpush.bf16.msra.mxu0 %v1285
    %1653 = vmatpush.bf16.msra.mxu0 %v1284
    %1654 = vmatpush.bf16.msra.mxu0 %v1283
    %1655 = vmatmul.bf16.gmra.mxu0 %v521
    %v1656 = vpop.f32.mrf.mxu0
    %v1657 = vadd.f32 %v1643, %v1656
    %v1658 = vpop.f32.mrf.mxu0
    %v1659 = vadd.f32 %v1645, %v1658
    %1660 = vdwg.mxu0
    %1661 = vmatpush.bf16.msra.mxu0 %v1298
    %1662 = vmatpush.bf16.msra.mxu0 %v1297
    %1663 = vmatpush.bf16.msra.mxu0 %v1296
    %1664 = vmatpush.bf16.msra.mxu0 %v1295
    %1665 = vmatpush.bf16.msra.mxu0 %v1294
    %1666 = vmatpush.bf16.msra.mxu0 %v1293
    %1667 = vmatpush.bf16.msra.mxu0 %v1292
    %1668 = vmatpush.bf16.msra.mxu0 %v1291
    %1669 = vmatmul.bf16.gmra.mxu0 %v522
    %v1670 = vpop.f32.mrf.mxu0
    %v1671 = vadd.f32 %v1657, %v1670
    %v1672 = vpop.f32.mrf.mxu0
    %v1673 = vadd.f32 %v1659, %v1672
    %1674 = vdwg.mxu0
    %1675 = vmatpush.bf16.msra.mxu0 %v1306
    %1676 = vmatpush.bf16.msra.mxu0 %v1305
    %1677 = vmatpush.bf16.msra.mxu0 %v1304
    %1678 = vmatpush.bf16.msra.mxu0 %v1303
    %1679 = vmatpush.bf16.msra.mxu0 %v1302
    %1680 = vmatpush.bf16.msra.mxu0 %v1301
    %1681 = vmatpush.bf16.msra.mxu0 %v1300
    %1682 = vmatpush.bf16.msra.mxu0 %v1299
    %1683 = vmatmul.bf16.gmra.mxu0 %v523
    %v1684 = vpop.f32.mrf.mxu0
    %v1685 = vadd.f32 %v1671, %v1684
    %v1686 = vpop.f32.mrf.mxu0
    %v1687 = vadd.f32 %v1673, %v1686
    %1688 = vdwg.mxu0
    %1689 = vmatpush.bf16.msra.mxu0 %v1314
    %1690 = vmatpush.bf16.msra.mxu0 %v1313
    %1691 = vmatpush.bf16.msra.mxu0 %v1312
    %1692 = vmatpush.bf16.msra.mxu0 %v1311
    %1693 = vmatpush.bf16.msra.mxu0 %v1310
    %1694 = vmatpush.bf16.msra.mxu0 %v1309
    %1695 = vmatpush.bf16.msra.mxu0 %v1308
    %1696 = vmatpush.bf16.msra.mxu0 %v1307
    %1697 = vmatmul.bf16.gmra.mxu0 %v524
    %v1698 = vpop.f32.mrf.mxu0
    %v1699 = vadd.f32 %v1685, %v1698
    %v1700 = vpop.f32.mrf.mxu0
    %v1701 = vadd.f32 %v1687, %v1700
    %1702 = vdwg.mxu0
    %1703 = vmatpush.bf16.msra.mxu0 %v1322
    %1704 = vmatpush.bf16.msra.mxu0 %v1321
    %1705 = vmatpush.bf16.msra.mxu0 %v1320
    %1706 = vmatpush.bf16.msra.mxu0 %v1319
    %1707 = vmatpush.bf16.msra.mxu0 %v1318
    %1708 = vmatpush.bf16.msra.mxu0 %v1317
    %1709 = vmatpush.bf16.msra.mxu0 %v1316
    %1710 = vmatpush.bf16.msra.mxu0 %v1315
    %1711 = vmatmul.bf16.gmra.mxu0 %v525
    %v1712 = vpop.f32.mrf.mxu0
    %v1713 = vadd.f32 %v1699, %v1712
    %v1714 = vpop.f32.mrf.mxu0
    %v1715 = vadd.f32 %v1701, %v1714
    %1716 = vdwg.mxu0
    %1717 = vmatpush.bf16.msra.mxu0 %v1330
    %1718 = vmatpush.bf16.msra.mxu0 %v1329
    %1719 = vmatpush.bf16.msra.mxu0 %v1328
    %1720 = vmatpush.bf16.msra.mxu0 %v1327
    %1721 = vmatpush.bf16.msra.mxu0 %v1326
    %1722 = vmatpush.bf16.msra.mxu0 %v1325
    %1723 = vmatpush.bf16.msra.mxu0 %v1324
    %1724 = vmatpush.bf16.msra.mxu0 %v1323
    %1725 = vmatmul.bf16.gmra.mxu0 %v526
    %v1726 = vpop.f32.mrf.mxu0
    %v1727 = vadd.f32 %v1713, %v1726
    %v1728 = vpop.f32.mrf.mxu0
    %v1729 = vadd.f32 %v1715, %v1728
    %1730 = vdwg.mxu0
    %1731 = vmatpush.bf16.msra.mxu0 %v1338
    %1732 = vmatpush.bf16.msra.mxu0 %v1337
    %1733 = vmatpush.bf16.msra.mxu0 %v1336
    %1734 = vmatpush.bf16.msra.mxu0 %v1335
    %1735 = vmatpush.bf16.msra.mxu0 %v1334
    %1736 = vmatpush.bf16.msra.mxu0 %v1333
    %1737 = vmatpush.bf16.msra.mxu0 %v1332
    %1738 = vmatpush.bf16.msra.mxu0 %v1331
    %1739 = vmatmul.bf16.gmra.mxu0 %v527
    %v1740 = vpop.f32.mrf.mxu0
    %v1741 = vadd.f32 %v1727, %v1740
    %v1742 = vpop.f32.mrf.mxu0
    %v1743 = vadd.f32 %v1729, %v1742
    %1744 = vdwg.mxu0
    %1745 = vmatpush.bf16.msra.mxu0 %v1346
    %1746 = vmatpush.bf16.msra.mxu0 %v1345
    %1747 = vmatpush.bf16.msra.mxu0 %v1344
    %1748 = vmatpush.bf16.msra.mxu0 %v1343
    %1749 = vmatpush.bf16.msra.mxu0 %v1342
    %1750 = vmatpush.bf16.msra.mxu0 %v1341
    %1751 = vmatpush.bf16.msra.mxu0 %v1340
    %1752 = vmatpush.bf16.msra.mxu0 %v1339
    %1753 = vmatmul.bf16.gmra.mxu0 %v528
    %v1754 = vpop.f32.mrf.mxu0
    %v1755 = vadd.f32 %v1741, %v1754
    %v1756 = vpop.f32.mrf.mxu0
    %v1757 = vadd.f32 %v1743, %v1756
    %1758 = vdwg.mxu0
    %1759 = vmatpush.bf16.msra.mxu0 %v1354
    %1760 = vmatpush.bf16.msra.mxu0 %v1353
    %1761 = vmatpush.bf16.msra.mxu0 %v1352
    %1762 = vmatpush.bf16.msra.mxu0 %v1351
    %1763 = vmatpush.bf16.msra.mxu0 %v1350
    %1764 = vmatpush.bf16.msra.mxu0 %v1349
    %1765 = vmatpush.bf16.msra.mxu0 %v1348
    %1766 = vmatpush.bf16.msra.mxu0 %v1347
    %1767 = vmatmul.bf16.gmra.mxu0 %v529
    %v1768 = vpop.f32.mrf.mxu0
    %v1769 = vadd.f32 %v1755, %v1768
    %v1770 = vpop.f32.mrf.mxu0
    %v1771 = vadd.f32 %v1757, %v1770
    %1772 = vdwg.mxu0
    %1773 = vmatpush.bf16.msra.mxu0 %v1362
    %1774 = vmatpush.bf16.msra.mxu0 %v1361
    %1775 = vmatpush.bf16.msra.mxu0 %v1360
    %1776 = vmatpush.bf16.msra.mxu0 %v1359
    %1777 = vmatpush.bf16.msra.mxu0 %v1358
    %1778 = vmatpush.bf16.msra.mxu0 %v1357
    %1779 = vmatpush.bf16.msra.mxu0 %v1356
    %1780 = vmatpush.bf16.msra.mxu0 %v1355
    %1781 = vmatmul.bf16.gmra.mxu0 %v530
    %v1782 = vpop.f32.mrf.mxu0
    %v1783 = vadd.f32 %v1769, %v1782
    %v1784 = vpop.f32.mrf.mxu0
    %v1785 = vadd.f32 %v1771, %v1784
    %1786 = vdwg.mxu0
    %1787 = vmatpush.bf16.msra.mxu0 %v1370
    %1788 = vmatpush.bf16.msra.mxu0 %v1369
    %1789 = vmatpush.bf16.msra.mxu0 %v1368
    %1790 = vmatpush.bf16.msra.mxu0 %v1367
    %1791 = vmatpush.bf16.msra.mxu0 %v1366
    %1792 = vmatpush.bf16.msra.mxu0 %v1365
    %1793 = vmatpush.bf16.msra.mxu0 %v1364
    %1794 = vmatpush.bf16.msra.mxu0 %v1363
    %1795 = vmatmul.bf16.gmra.mxu0 %v531
    %v1796 = vpop.f32.mrf.mxu0
    %v1797 = vadd.f32 %v1783, %v1796
    %v1798 = vpop.f32.mrf.mxu0
    %v1799 = vadd.f32 %v1785, %v1798
    %1800 = vdwg.mxu0
    %1801 = vmatpush.bf16.msra.mxu0 %v1378
    %1802 = vmatpush.bf16.msra.mxu0 %v1377
    %1803 = vmatpush.bf16.msra.mxu0 %v1376
    %1804 = vmatpush.bf16.msra.mxu0 %v1375
    %1805 = vmatpush.bf16.msra.mxu0 %v1374
    %1806 = vmatpush.bf16.msra.mxu0 %v1373
    %1807 = vmatpush.bf16.msra.mxu0 %v1372
    %1808 = vmatpush.bf16.msra.mxu0 %v1371
    %1809 = vmatmul.bf16.gmra.mxu0 %v532
    %v1810 = vpop.f32.mrf.mxu0
    %v1811 = vadd.f32 %v1797, %v1810
    %v1812 = vpop.f32.mrf.mxu0
    %v1813 = vadd.f32 %v1799, %v1812
    %1814 = vdwg.mxu0
    %1815 = vmatpush.bf16.msra.mxu0 %v1386
    %1816 = vmatpush.bf16.msra.mxu0 %v1385
    %1817 = vmatpush.bf16.msra.mxu0 %v1384
    %1818 = vmatpush.bf16.msra.mxu0 %v1383
    %1819 = vmatpush.bf16.msra.mxu0 %v1382
    %1820 = vmatpush.bf16.msra.mxu0 %v1381
    %1821 = vmatpush.bf16.msra.mxu0 %v1380
    %1822 = vmatpush.bf16.msra.mxu0 %v1379
    %1823 = vmatmul.bf16.gmra.mxu0 %v533
    %v1824 = vpop.f32.mrf.mxu0
    %v1825 = vadd.f32 %v1811, %v1824
    %v1826 = vpop.f32.mrf.mxu0
    %v1827 = vadd.f32 %v1813, %v1826
    %1828 = vdwg.mxu0
    %1829 = vmatpush.bf16.msra.mxu0 %v1394
    %1830 = vmatpush.bf16.msra.mxu0 %v1393
    %1831 = vmatpush.bf16.msra.mxu0 %v1392
    %1832 = vmatpush.bf16.msra.mxu0 %v1391
    %1833 = vmatpush.bf16.msra.mxu0 %v1390
    %1834 = vmatpush.bf16.msra.mxu0 %v1389
    %1835 = vmatpush.bf16.msra.mxu0 %v1388
    %1836 = vmatpush.bf16.msra.mxu0 %v1387
    %1837 = vmatmul.bf16.gmra.mxu0 %v534
    %v1838 = vpop.f32.mrf.mxu0
    %v1839 = vadd.f32 %v1825, %v1838
    %v1840 = vpop.f32.mrf.mxu0
    %v1841 = vadd.f32 %v1827, %v1840
    %1842 = vdwg.mxu0
    %1843 = vmatpush.bf16.msra.mxu0 %v1402
    %1844 = vmatpush.bf16.msra.mxu0 %v1401
    %1845 = vmatpush.bf16.msra.mxu0 %v1400
    %1846 = vmatpush.bf16.msra.mxu0 %v1399
    %1847 = vmatpush.bf16.msra.mxu0 %v1398
    %1848 = vmatpush.bf16.msra.mxu0 %v1397
    %1849 = vmatpush.bf16.msra.mxu0 %v1396
    %1850 = vmatpush.bf16.msra.mxu0 %v1395
    %1851 = vmatmul.bf16.gmra.mxu0 %v535
    %v1852 = vpop.f32.mrf.mxu0
    %v1853 = vadd.f32 %v1839, %v1852
    %v1854 = vpop.f32.mrf.mxu0
    %v1855 = vadd.f32 %v1841, %v1854
    %1856 = vdwg.mxu0
    %1857 = vmatpush.bf16.msra.mxu0 %v1410
    %1858 = vmatpush.bf16.msra.mxu0 %v1409
    %1859 = vmatpush.bf16.msra.mxu0 %v1408
    %1860 = vmatpush.bf16.msra.mxu0 %v1407
    %1861 = vmatpush.bf16.msra.mxu0 %v1406
    %1862 = vmatpush.bf16.msra.mxu0 %v1405
    %1863 = vmatpush.bf16.msra.mxu0 %v1404
    %1864 = vmatpush.bf16.msra.mxu0 %v1403
    %1865 = vmatmul.bf16.gmra.mxu0 %v536
    %v1866 = vpop.f32.mrf.mxu0
    %v1867 = vadd.f32 %v1853, %v1866
    %v1868 = vpop.f32.mrf.mxu0
    %v1869 = vadd.f32 %v1855, %v1868
    %1870 = vdwg.mxu0
    %1871 = vmatpush.bf16.msra.mxu0 %v1418
    %1872 = vmatpush.bf16.msra.mxu0 %v1417
    %1873 = vmatpush.bf16.msra.mxu0 %v1416
    %1874 = vmatpush.bf16.msra.mxu0 %v1415
    %1875 = vmatpush.bf16.msra.mxu0 %v1414
    %1876 = vmatpush.bf16.msra.mxu0 %v1413
    %1877 = vmatpush.bf16.msra.mxu0 %v1412
    %1878 = vmatpush.bf16.msra.mxu0 %v1411
    %1879 = vmatmul.bf16.gmra.mxu0 %v537
    %v1880 = vpop.f32.mrf.mxu0
    %v1881 = vadd.f32 %v1867, %v1880
    %v1882 = vpop.f32.mrf.mxu0
    %v1883 = vadd.f32 %v1869, %v1882
    %1884 = vdwg.mxu0
    %1885 = vmatpush.bf16.msra.mxu0 %v1426
    %1886 = vmatpush.bf16.msra.mxu0 %v1425
    %1887 = vmatpush.bf16.msra.mxu0 %v1424
    %1888 = vmatpush.bf16.msra.mxu0 %v1423
    %1889 = vmatpush.bf16.msra.mxu0 %v1422
    %1890 = vmatpush.bf16.msra.mxu0 %v1421
    %1891 = vmatpush.bf16.msra.mxu0 %v1420
    %1892 = vmatpush.bf16.msra.mxu0 %v1419
    %1893 = vmatmul.bf16.gmra.mxu0 %v538
    %v1894 = vpop.f32.mrf.mxu0
    %v1895 = vadd.f32 %v1881, %v1894
    %v1896 = vpop.f32.mrf.mxu0
    %v1897 = vadd.f32 %v1883, %v1896
    %1898 = vdwg.mxu0
    %1899 = vmatpush.bf16.msra.mxu0 %v1434
    %1900 = vmatpush.bf16.msra.mxu0 %v1433
    %1901 = vmatpush.bf16.msra.mxu0 %v1432
    %1902 = vmatpush.bf16.msra.mxu0 %v1431
    %1903 = vmatpush.bf16.msra.mxu0 %v1430
    %1904 = vmatpush.bf16.msra.mxu0 %v1429
    %1905 = vmatpush.bf16.msra.mxu0 %v1428
    %1906 = vmatpush.bf16.msra.mxu0 %v1427
    %1907 = vmatmul.bf16.gmra.mxu0 %v539
    %v1908 = vpop.f32.mrf.mxu0
    %v1909 = vadd.f32 %v1895, %v1908
    %v1910 = vpop.f32.mrf.mxu0
    %v1911 = vadd.f32 %v1897, %v1910
    %1912 = vdwg.mxu0
    %1913 = vmatpush.bf16.msra.mxu0 %v1442
    %1914 = vmatpush.bf16.msra.mxu0 %v1441
    %1915 = vmatpush.bf16.msra.mxu0 %v1440
    %1916 = vmatpush.bf16.msra.mxu0 %v1439
    %1917 = vmatpush.bf16.msra.mxu0 %v1438
    %1918 = vmatpush.bf16.msra.mxu0 %v1437
    %1919 = vmatpush.bf16.msra.mxu0 %v1436
    %1920 = vmatpush.bf16.msra.mxu0 %v1435
    %1921 = vmatmul.bf16.gmra.mxu0 %v540
    %v1922 = vpop.f32.mrf.mxu0
    %v1923 = vadd.f32 %v1909, %v1922
    %v1924 = vpop.f32.mrf.mxu0
    %v1925 = vadd.f32 %v1911, %v1924
    %1926 = vdwg.mxu0
    %v1927 = vmax.f32 %v1923, 0.0
    %v1928 = vmax.f32 %v1925, 0.0
    %v1929 = vpack.c.bf16 %v1928, %v1927
    %v1930 = vld [vmem:[#allocation7] sm:$0xf]
    %v1931 = vld [vmem:[#allocation7 + $0x4] sm:$0xf]
    %v1932 = vld [vmem:[#allocation7 + $0x8] sm:$0xf]
    %v1933 = vld [vmem:[#allocation7 + $0xc] sm:$0xf]
    %v1934 = vld [vmem:[#allocation7 + $0x10] sm:$0xf]
    %v1935 = vld [vmem:[#allocation7 + $0x14] sm:$0xf]
    %v1936 = vld [vmem:[#allocation7 + $0x18] sm:$0xf]
    %v1937 = vld [vmem:[#allocation7 + $0x1c] sm:$0xf]
    %v1938 = vld [vmem:[#allocation7 + $0x20] sm:$0xf]
    %v1939 = vld [vmem:[#allocation7 + $0x24] sm:$0xf]
    %v1940 = vld [vmem:[#allocation7 + $0x28] sm:$0xf]
    %v1941 = vld [vmem:[#allocation7 + $0x2c] sm:$0xf]
    %v1942 = vld [vmem:[#allocation7 + $0x30] sm:$0xf]
    %v1943 = vld [vmem:[#allocation7 + $0x34] sm:$0xf]
    %v1944 = vld [vmem:[#allocation7 + $0x38] sm:$0xf]
    %v1945 = vld [vmem:[#allocation7 + $0x3c] sm:$0xf]
    %v1946 = vld [vmem:[%s4] sm:$0x1]
    %v1948 = vperm.slane %v1946, 0
    %v1966 = vunpack.c.l.b16 %v1930
    %v1967 = vunpack.c.l.b16 %v1931
    %v1968 = vunpack.c.l.b16 %v1932
    %v1969 = vunpack.c.l.b16 %v1933
    %v1970 = vunpack.c.l.b16 %v1934
    %v1971 = vunpack.c.l.b16 %v1935
    %v1972 = vunpack.c.l.b16 %v1936
    %v1973 = vunpack.c.l.b16 %v1937
    %v1974 = vunpack.c.l.b16 %v1938
    %v1975 = vunpack.c.l.b16 %v1939
    %v1976 = vunpack.c.l.b16 %v1940
    %v1977 = vunpack.c.l.b16 %v1941
    %v1978 = vunpack.c.l.b16 %v1942
    %v1979 = vunpack.c.l.b16 %v1943
    %v1980 = vunpack.c.l.b16 %v1944
    %v1981 = vunpack.c.l.b16 %v1945
    %v1982 = vpack.c.b16 %v1967, %v1966
    %v1983 = vpack.c.b16 %v1969, %v1968
    %v1984 = vpack.c.b16 %v1971, %v1970
    %v1985 = vpack.c.b16 %v1973, %v1972
    %v1986 = vpack.c.b16 %v1975, %v1974
    %v1987 = vpack.c.b16 %v1977, %v1976
    %v1988 = vpack.c.b16 %v1979, %v1978
    %v1989 = vpack.c.b16 %v1981, %v1980
    %1998 = vmatpush.bf16.msra.mxu0 %v1989
    %1999 = vmatpush.bf16.msra.mxu0 %v1988
    %2000 = vmatpush.bf16.msra.mxu0 %v1987
    %2001 = vmatpush.bf16.msra.mxu0 %v1986
    %2002 = vmatpush.bf16.msra.mxu0 %v1985
    %2003 = vmatpush.bf16.msra.mxu0 %v1984
    %2004 = vmatpush.bf16.msra.mxu0 %v1983
    %2005 = vmatpush.bf16.msra.mxu0 %v1982
    %2006 = vmatmul.bf16.gmra.mxu0 %v1929
    %v2007 = vpop.f32.mrf.mxu0
    %v2008 = vadd.f32 %v1948, %v2007
    %v2009 = vpop.f32.mrf.mxu0
    %v2010 = vadd.f32 %v1948, %v2009
    %2011 = vdwg.mxu0
    %v2012 = vmax.f32 %v2008, 0.0
    %v2013 = vmax.f32 %v2010, 0.0
    %v2014 = vld [vmem:[%s5] sm:$0x1]
    %v2015 = vunpack.c.l.bf16 %v2014
    %v2016 = vperm.slane %v2015, 0
    %v2017 = vmul.f32 %v2012, %v2016
    %v2018 = vmul.f32 %v2013, %v2016
    %2019 = vadd.xlane.f32.xlu0 %v2017
    %v2020 = vpop.xlane.xlu0 %2019
    %2021 = vadd.xlane.f32.xlu0 %v2018
    %v2022 = vpop.xlane.xlu0 %2021
    %v2023 = vld [vmem:[#allocation2] sm:$0x1]
    %v2025 = vperm.slane %v2023, 0
    %v2027 = vadd.f32 %v2020, %v2025
    %v2028 = vadd.f32 %v2022, %v2025
    %v2029 = vsub.f32 0.0, %v2027
    %v2030 = vsub.f32 0.0, %v2028
    %v2031 = vmul.f32 %v2029, 1.442695
    %v2032 = vpow.pop %v2031
    %v2033 = vmul.f32 %v2030, 1.442695
    %v2034 = vpow.pop %v2033
    %v2035 = vadd.f32 %v2032, 1.0
    %v2036 = vadd.f32 %v2034, 1.0
    %v2037 = vrcp.pop %v2035
    %v2038 = vrcp.pop %v2036
    %vm2039 = vcmask 7168
    %2040 = vst.msk [vmem:[%s7] sm:$0xff] %vm2039, %v2037
    %2041 = vst.msk [vmem:[%s7 + $0x8] sm:$0xff] %vm2039, %v2038
    // Predicated region
    $region42: #{tpu_custom_call.1} parent=1 // pred_check
      _
    $region43: #{tpu_custom_call.1} parent=1 // pred_check_branch
      %2043 = sbr.rel (0) target = $region45
    $region44: #{tpu_custom_call.1} parent=1 // pred_region
      _
    $region45: #{tpu_custom_call.1} parent=1 // pred_fallthru
      _
    // Predicated region
    $region46: #{tpu_custom_call.1} parent=1 // pred_check
      _
    $region47: #{tpu_custom_call.1} parent=1 // pred_check_branch
      %2045 = sbr.rel (0) target = $region49
    $region48: #{tpu_custom_call.1} parent=1 // pred_region
      _
    $region49: #{tpu_custom_call.1} parent=1 // pred_fallthru
      _
    %2046 = vsyncpa [#allocation4], 1
    %2047 = vsyncpa [#allocation6], 1

</llo_original>
